<compile_context>
chip_gen: v6e
topology: v6e:2x2x1
jax: 0.10.0
libtpu: 0.0.40
codegen_flags: <defaults>
</compile_context>

<pallas_src>
import functools

import numpy as np
import jax
import jax.numpy as jnp
from jax.experimental import pallas as pl
from jax.experimental.pallas import tpu as pltpu


def _round_up(x, m):
    return ((x + m - 1) // m) * m


# -----------------------------------------------------------------------------
# Pallas kernel.  Grid = (G, n_token_tiles); the token-tile axis (innermost) is the
# reduction axis; S_v / S_all accumulate in f32 in the resident output blocks.
#   dist[g, j]   = || tokens[g, j, :] - anchor[g, :] ||_2        (j < n_tokens)
#   S_v[g]       = Σ_j vweight[g, j] * dist[g, j]
#   S_all[g]     = Σ_j dist[g, j]
#   abs_out[g,j] = Σ_c |tokens[g, j, c]|                          (for col_mask fusion)
# -----------------------------------------------------------------------------
def _triplet_dist_kernel(tok_ref, anc_ref, vw_ref, sv_ref, sall_ref, abs_ref,
                         *, n_tokens, tile_n):
    k = pl.program_id(1)

    @pl.when(k == 0)
    def _():
        sv_ref[...] = jnp.zeros_like(sv_ref)
        sall_ref[...] = jnp.zeros_like(sall_ref)

    tok = tok_ref[...].astype(jnp.float32)          # (1, tile_n, C)
    anc = anc_ref[...].astype(jnp.float32)          # (1, 1, C)  (sublane broadcast)

    # Tail mask for a partial last tile (N not a multiple of tile_n): no HBM-side pad
    # copy of the token tensor; mask BEFORE sqrt so NaN/Inf garbage cannot leak in.
    col = k * tile_n + jax.lax.broadcasted_iota(jnp.int32, (1, tile_n), 1)
    in_range = col < n_tokens                       # (1, tile_n) bool

    diff = tok - anc
    sq = jnp.sum(diff * diff, axis=-1)              # (1, tile_n)
    sq = jnp.where(in_range, sq, 0.0)
    dist = jnp.sqrt(sq)                             # (1, tile_n)

    absum = jnp.sum(jnp.abs(tok), axis=-1)          # (1, tile_n)
    abs_ref[...] = jnp.where(in_range, absum, 0.0)[:, None, :]

    vw = vw_ref[...][:, 0, :]                       # (1, tile_n) f32, lane-dense
    sv_ref[...] += jnp.sum(vw * dist)               # scalar -> broadcast into (1,1,128)
    sall_ref[...] += jnp.sum(dist)


def _dist_sums(tokens, anchor, vweights, *, token_block_bytes=4 * 1024 * 1024):
    """tokens (G,N,C), anchor (G,C), vweights (G,N) in {0,1}.
    Returns (S_v, S_all, abs_per_token) with shapes (G,), (G,), (G,N)."""
    G, N, C = tokens.shape
    itemsize = jnp.dtype(tokens.dtype).itemsize
    padded_C = _round_up(C, 128)                    # lane padding of the C axis in VMEM
    row_bytes = padded_C * itemsize

    # Token tile: multiple of 128 lanes on the weight side (also a sublane multiple for
    # f32/bf16/int8 tokens) unless one tile covers the whole row.
    cap = max(128, ((token_block_bytes // row_bytes) // 128) * 128)
    if N <= cap:
        tile_n, n_tiles = N, 1
    else:
        tile_n, n_tiles = cap, pl.cdiv(N, cap)
    Np = n_tiles * tile_n

    vw = vweights.astype(jnp.float32)
    if Np != N:                                     # cheap: (G, Np) only, never the tokens
        vw = jnp.pad(vw, ((0, 0), (0, Np - N)))
    vw = vw[:, None, :]                             # (G, 1, Np) lane-dense
    anchor3 = anchor[:, None, :]                    # (G, 1, C)

    # VMEM footprint (double-buffered blocks, lane/sublane padding accounted for).
    tok_blk = tile_n * row_bytes
    vec_blk = 8 * tile_n * 4                        # (1, tile_n) f32, 8-sublane padded
    anc_blk = 8 * padded_C * itemsize
    est = 2 * (tok_blk + vec_blk + vec_blk + anc_blk) + 4 * 8 * 128 * 4
    vmem_limit = int(min(max(2 * est + (8 << 20), 32 << 20), 64 << 20))

    kern = functools.partial(_triplet_dist_kernel, n_tokens=N, tile_n=tile_n)
    sv, sall, absum = pl.pallas_call(
        kern,
        out_shape=(
            jax.ShapeDtypeStruct((G, 1, 128), jnp.float32),
            jax.ShapeDtypeStruct((G, 1, 128), jnp.float32),
            jax.ShapeDtypeStruct((G, 1, Np), jnp.float32),
        ),
        grid_spec=pltpu.PrefetchScalarGridSpec(
            num_scalar_prefetch=0,
            grid=(G, n_tiles),
            in_specs=[
                pl.BlockSpec((1, tile_n, C), lambda g, k: (g, k, 0)),   # tokens
                pl.BlockSpec((1, 1, C), lambda g, k: (g, 0, 0)),        # anchor
                pl.BlockSpec((1, 1, tile_n), lambda g, k: (g, 0, k)),   # valid weight
            ],
            out_specs=[
                pl.BlockSpec((1, 1, 128), lambda g, k: (g, 0, 0)),      # S_v (accum)
                pl.BlockSpec((1, 1, 128), lambda g, k: (g, 0, 0)),      # S_all (accum)
                pl.BlockSpec((1, 1, tile_n), lambda g, k: (g, 0, k)),   # per-token |.| sum
            ],
        ),
        compiler_params=pltpu.CompilerParams(
            dimension_semantics=("parallel", "arbitrary"),
            vmem_limit_bytes=vmem_limit,
        ),
    )(tokens, anchor3, vw)

    return sv[:, 0, 0], sall[:, 0, 0], absum[:, 0, :N]


# -----------------------------------------------------------------------------
# PatchLoss forward (JAX wrapper + fused Pallas distance kernel).
# -----------------------------------------------------------------------------
def patch_loss(f_q, f_k, tau=0.07, *, token_block_bytes=4 * 1024 * 1024):
    """f_q: list of dicts with sel_tokens_{s,l} (B,N,C), idx_tokens_{s,l} (B,N) int,
    kernel_{s,l} (B,C,1).  f_k: (B, Ck, H, W) with H, W divisible by 32.
    Returns a scalar loss.  (tau unused, as in the PyTorch forward.)
    Assumes idx_tokens_* entries are unique per row, so the set-intersection checks
    reduce to positive/negative-count checks."""
    del tau
    B = f_k.shape[0]
    nb = len(f_q)
    # F.interpolate(..., scale_factor=1/8 | 1/32, mode='nearest') == strided subsample.
    valid_s = (f_k[:, :, ::8, ::8].sum(axis=1) > 0).reshape(B, -1)
    valid_l = (f_k[:, :, ::32, ::32].sum(axis=1) > 0).reshape(B, -1)

    per_scale = {}
    for suf, valid in (("s", valid_s), ("l", valid_l)):
        # Stack all transformer blocks into the G axis -> one pallas_call per scale.
        sel = jnp.concatenate([blk[f"sel_tokens_{suf}"] for blk in f_q], axis=0)       # (G,N,C)
        idx = jnp.concatenate([blk[f"idx_tokens_{suf}"] for blk in f_q],
                              axis=0).astype(jnp.int32)                                # (G,N)
        anc = jnp.concatenate([blk[f"kernel_{suf}"][..., 0] for blk in f_q], axis=0)   # (G,C)
        G, N, C = sel.shape

        valid_g = jnp.tile(valid, (nb, 1))                                             # (G,P)
        tok_valid = jnp.take_along_axis(valid_g, idx, axis=1)                          # (G,N) bool
        vw = tok_valid.astype(jnp.float32)

        sv, sall, absum = _dist_sums(sel, anc, vw, token_block_bytes=token_block_bytes)

        # col_mask (== sel.abs().sum((0,2)) != 0 per block) from the kernel's abs output.
        keep = absum.reshape(nb, B, N).sum(axis=1) != 0                                # (nb,N)
        keep_g = jnp.broadcast_to(keep[:, None, :], (nb, B, N)).reshape(G, N)
        drop_g = ~keep_g

        # A dropped token is all-zero, so its distance is exactly ||anchor||: subtract
        # its contribution analytically instead of re-reading sel for the mask.
        anorm = jnp.linalg.norm(anc.astype(jnp.float32), axis=1)                       # (G,)
        n_pos_drop = jnp.sum(drop_g & tok_valid, axis=1).astype(jnp.float32)
        n_neg_drop = jnp.sum(drop_g & ~tok_valid, axis=1).astype(jnp.float32)
        pos_sum = jnp.maximum(sv - anorm * n_pos_drop, 0.0)
        neg_sum = jnp.maximum((sall - sv) - anorm * n_neg_drop, 0.0)

        n_pos = jnp.sum(keep_g & tok_valid, axis=1).astype(jnp.float32)
        n_neg = jnp.sum(keep_g & ~tok_valid, axis=1).astype(jnp.float32)
        ok = (n_pos > 0) & (n_neg > 0)
        ap = pos_sum / jnp.maximum(n_pos, 1.0)
        an = neg_sum / jnp.maximum(n_neg, 1.0)
        # TripletLoss(margin=None): SoftMarginLoss(an - ap, 1) == softplus(ap - an)
        per_scale[suf] = (jax.nn.softplus(ap - an), ok)

    loss_s, ok_s = per_scale["s"]
    loss_l, ok_l = per_scale["l"]
    inc_s = ok_s
    inc_l = ok_s & ok_l          # the 'l' term is skipped whenever the 's' term was skipped
    total_loss = (jnp.sum(jnp.where(inc_s, loss_s, 0.0))
                  + jnp.sum(jnp.where(inc_l, loss_l, 0.0)))
    total_times = jnp.sum(inc_s.astype(jnp.float32)) + jnp.sum(inc_l.astype(jnp.float32))
    return jnp.where(total_times > 0,
                     total_loss / jnp.maximum(total_times, 1.0),
                     jnp.float32(0.0))


# -----------------------------------------------------------------------------
# Literal numpy reference mirroring the PyTorch PatchLoss.forward.
# -----------------------------------------------------------------------------
def _reference_patch_loss(f_q, f_k):
    f_k = np.asarray(f_k)
    B = f_k.shape[0]
    valid_s = (f_k[:, :, ::8, ::8].sum(axis=1) > 0).reshape(B, -1)
    valid_l = (f_k[:, :, ::32, ::32].sum(axis=1) > 0).reshape(B, -1)

    def soft_margin_triplet(anchor, pos, neg):
        ap = np.linalg.norm(anchor[None, :] - pos, axis=1).mean()
        an = np.linalg.norm(anchor[None, :] - neg, axis=1).mean()
        return np.logaddexp(0.0, ap - an)   # SoftMarginLoss(an - ap, y=1)

    total, times = 0.0, 0
    for block in f_q:
        sel_s = np.asarray(block["sel_tokens_s"]); idx_s = np.asarray(block["idx_tokens_s"])
        sel_l = np.asarray(block["sel_tokens_l"]); idx_l = np.asarray(block["idx_tokens_l"])
        ker_s = np.asarray(block["kernel_s"]); ker_l = np.asarray(block["kernel_l"])
        m_s = np.abs(sel_s).sum(axis=(0, 2)) != 0
        m_l = np.abs(sel_l).sum(axis=(0, 2)) != 0
        sel_s_m, idx_s_m = sel_s[:, m_s, :], idx_s[:, m_s]
        sel_l_m, idx_l_m = sel_l[:, m_l, :], idx_l[:, m_l]
        for i in range(B):
            gt_s = set(np.nonzero(valid_s[i])[0].tolist())
            tok_s = idx_s_m[i]
            common_s = gt_s & set(tok_s.tolist())
            if len(common_s) == 0 or len(common_s) == tok_s.size:
                continue
            pos_m = np.isin(tok_s, np.array(sorted(common_s)))
            neg_m = ~pos_m
            if pos_m.sum() == 0 or neg_m.sum() == 0:
                continue
            total += soft_margin_triplet(ker_s[i, :, 0], sel_s_m[i, pos_m, :], sel_s_m[i, neg_m, :])
            times += 1

            gt_l = set(np.nonzero(valid_l[i])[0].tolist())
            tok_l = idx_l_m[i]
            common_l = gt_l & set(tok_l.tolist())
            if len(common_l) == 0 or len(common_l) == tok_l.size:
                continue
            pos_ml = np.isin(tok_l, np.array(sorted(common_l)))
            neg_ml = ~pos_ml
            if pos_ml.sum() == 0 or neg_ml.sum() == 0:
                continue
            total += soft_margin_triplet(ker_l[i, :, 0], sel_l_m[i, pos_ml, :], sel_l_m[i, neg_ml, :])
            times += 1
    return np.float32(total / times) if times > 0 else np.float32(0.0)


if __name__ == "__main__":
    def make_inputs(key, B, Ck, H, W, C, n_blocks):
        Ns = (H // 8) * (W // 8)
        Nl = (H // 32) * (W // 32)
        keys = jax.random.split(key, 1 + 6 * n_blocks)
        f_k = jax.random.uniform(keys[0], (B, Ck, H, W), jnp.float32, 0.1, 1.0)
        f_k = f_k.at[:, :, : H // 4, :].set(0.0)   # make some spatial positions invalid
        f_q = []
        for b in range(n_blocks):
            k0, k1, k2, k3, k4, k5 = keys[1 + 6 * b: 7 + 6 * b]
            sel_s = jax.random.normal(k0, (B, Ns, C), jnp.float32)
            sel_s = sel_s.at[:, Ns - 4:, :].set(0.0)   # a few all-zero token columns
            idx_s = jnp.stack([jax.random.permutation(jax.random.fold_in(k1, i), Ns)
                               for i in range(B)]).astype(jnp.int32)
            sel_l = jax.random.normal(k2, (B, Nl, C), jnp.float32)
            sel_l = sel_l.at[:, Nl - 1:, :].set(0.0)
            idx_l = jnp.stack([jax.random.permutation(jax.random.fold_in(k3, i), Nl)
                               for i in range(B)]).astype(jnp.int32)
            ker_s = jax.random.normal(k4, (B, C, 1), jnp.float32)
            ker_l = jax.random.normal(k5, (B, C, 1), jnp.float32)
            f_q.append(dict(sel_tokens_s=sel_s, idx_tokens_s=idx_s,
                            sel_tokens_l=sel_l, idx_tokens_l=idx_l,
                            kernel_s=ker_s, kernel_l=ker_l))
        return f_q, f_k

    key1, key2 = jax.random.split(jax.random.PRNGKey(0))

    # Case 1: small shapes (single token tile per row, as in typical unit tests).
    f_q, f_k = make_inputs(key1, B=2, Ck=4, H=64, W=64, C=32, n_blocks=2)
    loss = jax.block_until_ready(jax.jit(patch_loss)(f_q, f_k))
    ref = _reference_patch_loss(f_q, f_k)
    assert loss.shape == ()
    assert np.isfinite(float(loss))
    assert abs(float(loss) - float(ref)) <= 1e-4 * max(1.0, abs(float(ref))), (float(loss), float(ref))

    # Case 2: larger token count with a forced-small tile budget -> exercises the
    # multi-tile reduction axis and the in-kernel masked partial last tile
    # (Ns = 400 tokens, tile_n = 128 -> 3 full tiles + 1 partial).
    f_q2, f_k2 = make_inputs(key2, B=2, Ck=4, H=160, W=160, C=32, n_blocks=2)
    small_fn = functools.partial(patch_loss, token_block_bytes=128 * 512)
    loss2 = jax.block_until_ready(jax.jit(small_fn)(f_q2, f_k2))
    ref2 = _reference_patch_loss(f_q2, f_k2)
    assert np.isfinite(float(loss2))
    assert abs(float(loss2) - float(ref2)) <= 1e-4 * max(1.0, abs(float(ref2))), (float(loss2), float(ref2))

    print("KERNEL_OK")
</pallas_src>

<mosaic_0001>
module attributes {stable_mosaic.version = 11 : i64} {
  func.func @_triplet_dist_kernel(%arg0: i32, %arg1: i32, %arg2: memref<1x4x32xf32, #tpu.memory_space<vmem>>, %arg3: memref<1x1x32xf32, #tpu.memory_space<vmem>>, %arg4: memref<1x1x4xf32, #tpu.memory_space<vmem>>, %arg5: memref<1x1x128xf32, #tpu.memory_space<vmem>>, %arg6: memref<1x1x128xf32, #tpu.memory_space<vmem>>, %arg7: memref<1x1x4xf32, #tpu.memory_space<vmem>>) attributes {dimension_semantics = [#tpu.dimension_semantics<parallel>, #tpu.dimension_semantics<arbitrary>], iteration_bounds = array<i64: 4, 1>, scalar_prefetch = 0 : i64, scratch_operands = 0 : i64, tpu.core_type = #tpu.core_type<tc>, window_params = [{transform_indices = @transform_0, window_bounds = array<i64: 1, 4, 32>}, {transform_indices = @transform_1, window_bounds = array<i64: 1, 1, 32>}, {transform_indices = @transform_2, window_bounds = array<i64: 1, 1, 4>}, {transform_indices = @transform_3, window_bounds = array<i64: 1, 1, 128>}, {transform_indices = @transform_4, window_bounds = array<i64: 1, 1, 128>}, {transform_indices = @transform_5, window_bounds = array<i64: 1, 1, 4>}]} {
    %c0_i32 = arith.constant 0 : i32
    %0 = arith.cmpi eq, %arg1, %c0_i32 : i32
    %1 = arith.extui %0 : i1 to i32
    %c0_i32_0 = arith.constant 0 : i32
    %2 = arith.cmpi ne, %1, %c0_i32_0 : i32
    scf.if %2 {
      %cst_30 = arith.constant 0.000000e+00 : f32
      %43 = vector.broadcast %cst_30 : f32 to vector<1x1x128xf32>
      %c0_31 = arith.constant 0 : index
      %c0_32 = arith.constant 0 : index
      %c0_33 = arith.constant 0 : index
      %44 = vector.load %arg5[%c0_31, %c0_32, %c0_33] : memref<1x1x128xf32, #tpu.memory_space<vmem>>, vector<1x1x128xf32>
      tpu.vector_store %arg5[%c0_31, %c0_32, %c0_33], %43 {strides = array<i32>} : memref<1x1x128xf32, #tpu.memory_space<vmem>>, vector<1x1x128xf32>,
      %cst_34 = arith.constant 0.000000e+00 : f32
      %45 = vector.broadcast %cst_34 : f32 to vector<1x1x128xf32>
      %c0_35 = arith.constant 0 : index
      %c0_36 = arith.constant 0 : index
      %c0_37 = arith.constant 0 : index
      %46 = vector.load %arg6[%c0_35, %c0_36, %c0_37] : memref<1x1x128xf32, #tpu.memory_space<vmem>>, vector<1x1x128xf32>
      tpu.vector_store %arg6[%c0_35, %c0_36, %c0_37], %45 {strides = array<i32>} : memref<1x1x128xf32, #tpu.memory_space<vmem>>, vector<1x1x128xf32>,
    } else {
    }
    %c0 = arith.constant 0 : index
    %c0_1 = arith.constant 0 : index
    %c0_2 = arith.constant 0 : index
    %3 = vector.load %arg2[%c0, %c0_1, %c0_2] : memref<1x4x32xf32, #tpu.memory_space<vmem>>, vector<1x4x32xf32>
    %c0_3 = arith.constant 0 : index
    %c0_4 = arith.constant 0 : index
    %c0_5 = arith.constant 0 : index
    %4 = vector.load %arg3[%c0_3, %c0_4, %c0_5] : memref<1x1x32xf32, #tpu.memory_space<vmem>>, vector<1x1x32xf32>
    %c4_i32 = arith.constant 4 : i32
    %5 = arith.muli %arg1, %c4_i32 : i32
    %6 = tpu.iota {dimensions = array<i32: 1>} : vector<1x4xi32>
    %7 = vector.broadcast %5 : i32 to vector<1x4xi32>
    %8 = arith.addi %7, %6 : vector<1x4xi32>
    %c4_i32_6 = arith.constant 4 : i32
    %9 = vector.broadcast %c4_i32_6 : i32 to vector<1x4xi32>
    %10 = arith.cmpi slt, %8, %9 : vector<1x4xi32>
    %11 = vector.broadcast %4 : vector<1x1x32xf32> to vector<1x4x32xf32>
    %12 = arith.subf %3, %11 : vector<1x4x32xf32>
    %13 = arith.mulf %12, %12 : vector<1x4x32xf32>
    %cst = arith.constant dense<0.000000e+00> : vector<1x4xf32>
    %14 = vector.multi_reduction <add>, %13, %cst [2] : vector<1x4x32xf32> to vector<1x4xf32>
    %cst_7 = arith.constant 0.000000e+00 : f32
    %15 = vector.broadcast %cst_7 : f32 to vector<1x4xf32>
    %16 = arith.select %10, %14, %15 : vector<1x4xi1>, vector<1x4xf32>
    %17 = math.sqrt %16 : vector<1x4xf32>
    %18 = math.absf %3 : vector<1x4x32xf32>
    %cst_8 = arith.constant dense<0.000000e+00> : vector<1x4xf32>
    %19 = vector.multi_reduction <add>, %18, %cst_8 [2] : vector<1x4x32xf32> to vector<1x4xf32>
    %cst_9 = arith.constant 0.000000e+00 : f32
    %20 = vector.broadcast %cst_9 : f32 to vector<1x4xf32>
    %21 = arith.select %10, %19, %20 : vector<1x4xi1>, vector<1x4xf32>
    %22 = vector.shape_cast %21 : vector<1x4xf32> to vector<1x1x4xf32>
    %c0_10 = arith.constant 0 : index
    %c0_11 = arith.constant 0 : index
    %c0_12 = arith.constant 0 : index
    %23 = vector.load %arg7[%c0_10, %c0_11, %c0_12] : memref<1x1x4xf32, #tpu.memory_space<vmem>>, vector<1x1x4xf32>
    tpu.vector_store %arg7[%c0_10, %c0_11, %c0_12], %22 {strides = array<i32>} : memref<1x1x4xf32, #tpu.memory_space<vmem>>, vector<1x1x4xf32>,
    %c0_13 = arith.constant 0 : index
    %c0_14 = arith.constant 0 : index
    %c0_15 = arith.constant 0 : index
    %24 = vector.load %arg4[%c0_13, %c0_14, %c0_15] : memref<1x1x4xf32, #tpu.memory_space<vmem>>, vector<1x1x4xf32>
    %25 = vector.shape_cast %24 : vector<1x1x4xf32> to vector<1x4xf32>
    %c0_16 = arith.constant 0 : index
    %c0_17 = arith.constant 0 : index
    %c0_18 = arith.constant 0 : index
    %26 = vector.load %arg5[%c0_16, %c0_17, %c0_18] : memref<1x1x128xf32, #tpu.memory_space<vmem>>, vector<1x1x128xf32>
    %27 = arith.mulf %25, %17 : vector<1x4xf32>
    %28 = vector.shape_cast %27 : vector<1x4xf32> to vector<1x1x4xf32>
    %cst_19 = arith.constant dense<0.000000e+00> : vector<1xf32>
    %29 = vector.multi_reduction <add>, %28, %cst_19 [1, 2] : vector<1x1x4xf32> to vector<1xf32>
    %30 = vector.shape_cast %29 : vector<1xf32> to vector<1x1x1xf32>
    %31 = vector.extract %30[0, 0, 0] : f32 from vector<1x1x1xf32>
    %32 = vector.broadcast %31 : f32 to vector<1x1x128xf32>
    %33 = arith.addf %26, %32 : vector<1x1x128xf32>
    %c0_20 = arith.constant 0 : index
    %c0_21 = arith.constant 0 : index
    %c0_22 = arith.constant 0 : index
    %34 = vector.load %arg5[%c0_20, %c0_21, %c0_22] : memref<1x1x128xf32, #tpu.memory_space<vmem>>, vector<1x1x128xf32>
    tpu.vector_store %arg5[%c0_20, %c0_21, %c0_22], %33 {strides = array<i32>} : memref<1x1x128xf32, #tpu.memory_space<vmem>>, vector<1x1x128xf32>,
    %c0_23 = arith.constant 0 : index
    %c0_24 = arith.constant 0 : index
    %c0_25 = arith.constant 0 : index
    %35 = vector.load %arg6[%c0_23, %c0_24, %c0_25] : memref<1x1x128xf32, #tpu.memory_space<vmem>>, vector<1x1x128xf32>
    %36 = vector.shape_cast %17 : vector<1x4xf32> to vector<1x1x4xf32>
    %cst_26 = arith.constant dense<0.000000e+00> : vector<1xf32>
    %37 = vector.multi_reduction <add>, %36, %cst_26 [1, 2] : vector<1x1x4xf32> to vector<1xf32>
    %38 = vector.shape_cast %37 : vector<1xf32> to vector<1x1x1xf32>
    %39 = vector.extract %38[0, 0, 0] : f32 from vector<1x1x1xf32>
    %40 = vector.broadcast %39 : f32 to vector<1x1x128xf32>
    %41 = arith.addf %35, %40 : vector<1x1x128xf32>
    %c0_27 = arith.constant 0 : index
    %c0_28 = arith.constant 0 : index
    %c0_29 = arith.constant 0 : index
    %42 = vector.load %arg6[%c0_27, %c0_28, %c0_29] : memref<1x1x128xf32, #tpu.memory_space<vmem>>, vector<1x1x128xf32>
    tpu.vector_store %arg6[%c0_27, %c0_28, %c0_29], %41 {strides = array<i32>} : memref<1x1x128xf32, #tpu.memory_space<vmem>>, vector<1x1x128xf32>,
    return
  }
  func.func @transform_0(%arg0: i32, %arg1: i32) -> (i32, i32, i32) {
    %c0_i32 = arith.constant 0 : i32
    %c0_i32_0 = arith.constant 0 : i32
    return %arg0, %arg1, %c0_i32 : i32, i32, i32
  }
  func.func @transform_1(%arg0: i32, %arg1: i32) -> (i32, i32, i32) {
    %c0_i32 = arith.constant 0 : i32
    %c0_i32_0 = arith.constant 0 : i32
    %c0_i32_1 = arith.constant 0 : i32
    return %arg0, %c0_i32, %c0_i32_0 : i32, i32, i32
  }
  func.func @transform_2(%arg0: i32, %arg1: i32) -> (i32, i32, i32) {
    %c0_i32 = arith.constant 0 : i32
    %c0_i32_0 = arith.constant 0 : i32
    return %arg0, %c0_i32, %arg1 : i32, i32, i32
  }
  func.func @transform_3(%arg0: i32, %arg1: i32) -> (i32, i32, i32) {
    %c0_i32 = arith.constant 0 : i32
    %c0_i32_0 = arith.constant 0 : i32
    %c0_i32_1 = arith.constant 0 : i32
    return %arg0, %c0_i32, %c0_i32_0 : i32, i32, i32
  }
  func.func @transform_4(%arg0: i32, %arg1: i32) -> (i32, i32, i32) {
    %c0_i32 = arith.constant 0 : i32
    %c0_i32_0 = arith.constant 0 : i32
    %c0_i32_1 = arith.constant 0 : i32
    return %arg0, %c0_i32, %c0_i32_0 : i32, i32, i32
  }
  func.func @transform_5(%arg0: i32, %arg1: i32) -> (i32, i32, i32) {
    %c0_i32 = arith.constant 0 : i32
    %c0_i32_0 = arith.constant 0 : i32
    return %arg0, %c0_i32, %arg1 : i32, i32, i32
  }
}

module attributes {stable_mosaic.version = 11 : i64} {
  func.func @_triplet_dist_kernel(%arg0: i32, %arg1: i32, %arg2: memref<1x64x32xf32, #tpu.memory_space<vmem>>, %arg3: memref<1x1x32xf32, #tpu.memory_space<vmem>>, %arg4: memref<1x1x64xf32, #tpu.memory_space<vmem>>, %arg5: memref<1x1x128xf32, #tpu.memory_space<vmem>>, %arg6: memref<1x1x128xf32, #tpu.memory_space<vmem>>, %arg7: memref<1x1x64xf32, #tpu.memory_space<vmem>>) attributes {dimension_semantics = [#tpu.dimension_semantics<parallel>, #tpu.dimension_semantics<arbitrary>], iteration_bounds = array<i64: 4, 1>, scalar_prefetch = 0 : i64, scratch_operands = 0 : i64, tpu.core_type = #tpu.core_type<tc>, window_params = [{transform_indices = @transform_0, window_bounds = array<i64: 1, 64, 32>}, {transform_indices = @transform_1, window_bounds = array<i64: 1, 1, 32>}, {transform_indices = @transform_2, window_bounds = array<i64: 1, 1, 64>}, {transform_indices = @transform_3, window_bounds = array<i64: 1, 1, 128>}, {transform_indices = @transform_4, window_bounds = array<i64: 1, 1, 128>}, {transform_indices = @transform_5, window_bounds = array<i64: 1, 1, 64>}]} {
    %c0_i32 = arith.constant 0 : i32
    %0 = arith.cmpi eq, %arg1, %c0_i32 : i32
    %1 = arith.extui %0 : i1 to i32
    %c0_i32_0 = arith.constant 0 : i32
    %2 = arith.cmpi ne, %1, %c0_i32_0 : i32
    scf.if %2 {
      %cst_30 = arith.constant 0.000000e+00 : f32
      %43 = vector.broadcast %cst_30 : f32 to vector<1x1x128xf32>
      %c0_31 = arith.constant 0 : index
      %c0_32 = arith.constant 0 : index
      %c0_33 = arith.constant 0 : index
      %44 = vector.load %arg5[%c0_31, %c0_32, %c0_33] : memref<1x1x128xf32, #tpu.memory_space<vmem>>, vector<1x1x128xf32>
      tpu.vector_store %arg5[%c0_31, %c0_32, %c0_33], %43 {strides = array<i32>} : memref<1x1x128xf32, #tpu.memory_space<vmem>>, vector<1x1x128xf32>,
      %cst_34 = arith.constant 0.000000e+00 : f32
      %45 = vector.broadcast %cst_34 : f32 to vector<1x1x128xf32>
      %c0_35 = arith.constant 0 : index
      %c0_36 = arith.constant 0 : index
      %c0_37 = arith.constant 0 : index
      %46 = vector.load %arg6[%c0_35, %c0_36, %c0_37] : memref<1x1x128xf32, #tpu.memory_space<vmem>>, vector<1x1x128xf32>
      tpu.vector_store %arg6[%c0_35, %c0_36, %c0_37], %45 {strides = array<i32>} : memref<1x1x128xf32, #tpu.memory_space<vmem>>, vector<1x1x128xf32>,
    } else {
    }
    %c0 = arith.constant 0 : index
    %c0_1 = arith.constant 0 : index
    %c0_2 = arith.constant 0 : index
    %3 = vector.load %arg2[%c0, %c0_1, %c0_2] : memref<1x64x32xf32, #tpu.memory_space<vmem>>, vector<1x64x32xf32>
    %c0_3 = arith.constant 0 : index
    %c0_4 = arith.constant 0 : index
    %c0_5 = arith.constant 0 : index
    %4 = vector.load %arg3[%c0_3, %c0_4, %c0_5] : memref<1x1x32xf32, #tpu.memory_space<vmem>>, vector<1x1x32xf32>
    %c64_i32 = arith.constant 64 : i32
    %5 = arith.muli %arg1, %c64_i32 : i32
    %6 = tpu.iota {dimensions = array<i32: 1>} : vector<1x64xi32>
    %7 = vector.broadcast %5 : i32 to vector<1x64xi32>
    %8 = arith.addi %7, %6 : vector<1x64xi32>
    %c64_i32_6 = arith.constant 64 : i32
    %9 = vector.broadcast %c64_i32_6 : i32 to vector<1x64xi32>
    %10 = arith.cmpi slt, %8, %9 : vector<1x64xi32>
    %11 = vector.broadcast %4 : vector<1x1x32xf32> to vector<1x64x32xf32>
    %12 = arith.subf %3, %11 : vector<1x64x32xf32>
    %13 = arith.mulf %12, %12 : vector<1x64x32xf32>
    %cst = arith.constant dense<0.000000e+00> : vector<1x64xf32>
    %14 = vector.multi_reduction <add>, %13, %cst [2] : vector<1x64x32xf32> to vector<1x64xf32>
    %cst_7 = arith.constant 0.000000e+00 : f32
    %15 = vector.broadcast %cst_7 : f32 to vector<1x64xf32>
    %16 = arith.select %10, %14, %15 : vector<1x64xi1>, vector<1x64xf32>
    %17 = math.sqrt %16 : vector<1x64xf32>
    %18 = math.absf %3 : vector<1x64x32xf32>
    %cst_8 = arith.constant dense<0.000000e+00> : vector<1x64xf32>
    %19 = vector.multi_reduction <add>, %18, %cst_8 [2] : vector<1x64x32xf32> to vector<1x64xf32>
    %cst_9 = arith.constant 0.000000e+00 : f32
    %20 = vector.broadcast %cst_9 : f32 to vector<1x64xf32>
    %21 = arith.select %10, %19, %20 : vector<1x64xi1>, vector<1x64xf32>
    %22 = vector.shape_cast %21 : vector<1x64xf32> to vector<1x1x64xf32>
    %c0_10 = arith.constant 0 : index
    %c0_11 = arith.constant 0 : index
    %c0_12 = arith.constant 0 : index
    %23 = vector.load %arg7[%c0_10, %c0_11, %c0_12] : memref<1x1x64xf32, #tpu.memory_space<vmem>>, vector<1x1x64xf32>
    tpu.vector_store %arg7[%c0_10, %c0_11, %c0_12], %22 {strides = array<i32>} : memref<1x1x64xf32, #tpu.memory_space<vmem>>, vector<1x1x64xf32>,
    %c0_13 = arith.constant 0 : index
    %c0_14 = arith.constant 0 : index
    %c0_15 = arith.constant 0 : index
    %24 = vector.load %arg4[%c0_13, %c0_14, %c0_15] : memref<1x1x64xf32, #tpu.memory_space<vmem>>, vector<1x1x64xf32>
    %25 = vector.shape_cast %24 : vector<1x1x64xf32> to vector<1x64xf32>
    %c0_16 = arith.constant 0 : index
    %c0_17 = arith.constant 0 : index
    %c0_18 = arith.constant 0 : index
    %26 = vector.load %arg5[%c0_16, %c0_17, %c0_18] : memref<1x1x128xf32, #tpu.memory_space<vmem>>, vector<1x1x128xf32>
    %27 = arith.mulf %25, %17 : vector<1x64xf32>
    %28 = vector.shape_cast %27 : vector<1x64xf32> to vector<1x1x64xf32>
    %cst_19 = arith.constant dense<0.000000e+00> : vector<1xf32>
    %29 = vector.multi_reduction <add>, %28, %cst_19 [1, 2] : vector<1x1x64xf32> to vector<1xf32>
    %30 = vector.shape_cast %29 : vector<1xf32> to vector<1x1x1xf32>
    %31 = vector.extract %30[0, 0, 0] : f32 from vector<1x1x1xf32>
    %32 = vector.broadcast %31 : f32 to vector<1x1x128xf32>
    %33 = arith.addf %26, %32 : vector<1x1x128xf32>
    %c0_20 = arith.constant 0 : index
    %c0_21 = arith.constant 0 : index
    %c0_22 = arith.constant 0 : index
    %34 = vector.load %arg5[%c0_20, %c0_21, %c0_22] : memref<1x1x128xf32, #tpu.memory_space<vmem>>, vector<1x1x128xf32>
    tpu.vector_store %arg5[%c0_20, %c0_21, %c0_22], %33 {strides = array<i32>} : memref<1x1x128xf32, #tpu.memory_space<vmem>>, vector<1x1x128xf32>,
    %c0_23 = arith.constant 0 : index
    %c0_24 = arith.constant 0 : index
    %c0_25 = arith.constant 0 : index
    %35 = vector.load %arg6[%c0_23, %c0_24, %c0_25] : memref<1x1x128xf32, #tpu.memory_space<vmem>>, vector<1x1x128xf32>
    %36 = vector.shape_cast %17 : vector<1x64xf32> to vector<1x1x64xf32>
    %cst_26 = arith.constant dense<0.000000e+00> : vector<1xf32>
    %37 = vector.multi_reduction <add>, %36, %cst_26 [1, 2] : vector<1x1x64xf32> to vector<1xf32>
    %38 = vector.shape_cast %37 : vector<1xf32> to vector<1x1x1xf32>
    %39 = vector.extract %38[0, 0, 0] : f32 from vector<1x1x1xf32>
    %40 = vector.broadcast %39 : f32 to vector<1x1x128xf32>
    %41 = arith.addf %35, %40 : vector<1x1x128xf32>
    %c0_27 = arith.constant 0 : index
    %c0_28 = arith.constant 0 : index
    %c0_29 = arith.constant 0 : index
    %42 = vector.load %arg6[%c0_27, %c0_28, %c0_29] : memref<1x1x128xf32, #tpu.memory_space<vmem>>, vector<1x1x128xf32>
    tpu.vector_store %arg6[%c0_27, %c0_28, %c0_29], %41 {strides = array<i32>} : memref<1x1x128xf32, #tpu.memory_space<vmem>>, vector<1x1x128xf32>,
    return
  }
  func.func @transform_0(%arg0: i32, %arg1: i32) -> (i32, i32, i32) {
    %c0_i32 = arith.constant 0 : i32
    %c0_i32_0 = arith.constant 0 : i32
    return %arg0, %arg1, %c0_i32 : i32, i32, i32
  }
  func.func @transform_1(%arg0: i32, %arg1: i32) -> (i32, i32, i32) {
    %c0_i32 = arith.constant 0 : i32
    %c0_i32_0 = arith.constant 0 : i32
    %c0_i32_1 = arith.constant 0 : i32
    return %arg0, %c0_i32, %c0_i32_0 : i32, i32, i32
  }
  func.func @transform_2(%arg0: i32, %arg1: i32) -> (i32, i32, i32) {
    %c0_i32 = arith.constant 0 : i32
    %c0_i32_0 = arith.constant 0 : i32
    return %arg0, %c0_i32, %arg1 : i32, i32, i32
  }
  func.func @transform_3(%arg0: i32, %arg1: i32) -> (i32, i32, i32) {
    %c0_i32 = arith.constant 0 : i32
    %c0_i32_0 = arith.constant 0 : i32
    %c0_i32_1 = arith.constant 0 : i32
    return %arg0, %c0_i32, %c0_i32_0 : i32, i32, i32
  }
  func.func @transform_4(%arg0: i32, %arg1: i32) -> (i32, i32, i32) {
    %c0_i32 = arith.constant 0 : i32
    %c0_i32_0 = arith.constant 0 : i32
    %c0_i32_1 = arith.constant 0 : i32
    return %arg0, %c0_i32, %c0_i32_0 : i32, i32, i32
  }
  func.func @transform_5(%arg0: i32, %arg1: i32) -> (i32, i32, i32) {
    %c0_i32 = arith.constant 0 : i32
    %c0_i32_0 = arith.constant 0 : i32
    return %arg0, %c0_i32, %arg1 : i32, i32, i32
  }
}

</mosaic_0001>

<llo_original>
// kernel: tile.15
$region0: #{tile.15}
  %s0 = inlined_call_operand.vmem [shape: pred[2,2,4], index: 0, kind: input, shape index: {}]
  %s1 = inlined_call_operand.vmem [shape: pred[4,4], index: 1, kind: output, shape index: {}]
  $region1: #{tile.15} parent=0
    #allocation0 [shape = 'u8[4096]{0}', space=vmem, size = 0x1000, scoped, tag = 'scoped mem for output reshape']
    #allocation1 [shape = 'u8[8192]{0}', space=vmem, size = 0x2000, scoped, tag = 'scoped mem for input reshape']
    %s3 = smul.u32 1, 4
    %s4 = sshll.u32 1, %s3
    %s5 = ssub.s32 %s4, 1
    %s6 = sand.u32 %s5, 15
    %p7 = scmp.ne.s32.totalorder %s6, 0
    %s8 = scalar_select %p7, 1, 0
    %s9 = sand.u32 %s5, 240
    %p10 = scmp.ne.s32.totalorder %s9, 0
    %s11 = scalar_select %p10, 2, 0
    %s12 = sor.u32 %s8, %s11
    %s13 = scalar_lea.vmem %s0, 1
    %v14 = vld [vmem:[%s13] sm:%s12]
    %v15 = vunpack.c.0.s8 %v14
    %v16 = vunpack.c.1.s8 %v14
    %v17 = vunpack.c.2.s8 %v14
    %v18 = vunpack.c.3.s8 %v14
    %s19 = scalar_lea.vmem [#allocation1], 8
    %20 = vst [vmem:[%s19] sm:%s5] %v15
    %s21 = sand.u32 %s5, 15
    %p22 = scmp.ne.s32.totalorder %s21, 0
    %s23 = scalar_select %p22, 1, 0
    %s24 = sand.u32 %s5, 240
    %p25 = scmp.ne.s32.totalorder %s24, 0
    %s26 = scalar_select %p25, 2, 0
    %s27 = sor.u32 %s23, %s26
    %v28 = vld [vmem:[%s0] sm:%s27]
    %v29 = vunpack.c.0.s8 %v28
    %v30 = vunpack.c.1.s8 %v28
    %v31 = vunpack.c.2.s8 %v28
    %v32 = vunpack.c.3.s8 %v28
    %33 = vst [vmem:[#allocation1] sm:%s5] %v29
    %v34 = vld [vmem:[#allocation1] sm:$0x3]
    %vm35 = vcmask 31744
    %36 = vst.msk [vmem:[#allocation0] sm:$0x3] %vm35, %v34
    %s37 = scalar_lea.vmem [#allocation1], 8
    %v38 = vld [vmem:[%s37] sm:$0x3]
    %vm39 = vcmask 31744
    %s40 = scalar_lea.vmem [#allocation0], 2
    %41 = vst.msk [vmem:[%s40] sm:$0x3] %vm39, %v38
    %s43 = smul.u32 1, 4
    %s44 = sshll.u32 1, %s43
    %s45 = ssub.s32 %s44, 1
    %s46 = sshrl.u32 %s43, 2
    %v47 = vld [vmem:[#allocation0] sm:%s45]
    %s48 = sshll.u32 1, %s46
    %s49 = ssub.s32 %s48, 1
    %v50 = vpack.c.b16 0, %v47
    %v51 = vpack.c.b8 0, %v50
    %52 = vst [vmem:[%s1] sm:%s49] %v51

// kernel: tile.11
$region0: #{tile.11}
  %s0 = inlined_call_operand.vmem [shape: pred[2,2,64], index: 0, kind: input, shape index: {}]
  %s1 = inlined_call_operand.vmem [shape: pred[4,64], index: 1, kind: output, shape index: {}]
  $region1: #{tile.11} parent=0
    #allocation0 [shape = 'u8[4096]{0}', space=vmem, size = 0x1000, scoped, tag = 'scoped mem for output reshape']
    #allocation1 [shape = 'u8[8192]{0}', space=vmem, size = 0x2000, scoped, tag = 'scoped mem for input reshape']
    %s3 = smul.u32 1, 4
    %s4 = sshll.u32 1, %s3
    %s5 = ssub.s32 %s4, 1
    %s6 = sand.u32 %s5, 15
    %p7 = scmp.ne.s32.totalorder %s6, 0
    %s8 = scalar_select %p7, 1, 0
    %s9 = sand.u32 %s5, 240
    %p10 = scmp.ne.s32.totalorder %s9, 0
    %s11 = scalar_select %p10, 2, 0
    %s12 = sor.u32 %s8, %s11
    %s13 = scalar_lea.vmem %s0, 1
    %v14 = vld [vmem:[%s13] sm:%s12]
    %v15 = vunpack.c.0.s8 %v14
    %v16 = vunpack.c.1.s8 %v14
    %v17 = vunpack.c.2.s8 %v14
    %v18 = vunpack.c.3.s8 %v14
    %s19 = scalar_lea.vmem [#allocation1], 8
    %20 = vst [vmem:[%s19] sm:%s5] %v15
    %s21 = sand.u32 %s5, 15
    %p22 = scmp.ne.s32.totalorder %s21, 0
    %s23 = scalar_select %p22, 1, 0
    %s24 = sand.u32 %s5, 240
    %p25 = scmp.ne.s32.totalorder %s24, 0
    %s26 = scalar_select %p25, 2, 0
    %s27 = sor.u32 %s23, %s26
    %v28 = vld [vmem:[%s0] sm:%s27]
    %v29 = vunpack.c.0.s8 %v28
    %v30 = vunpack.c.1.s8 %v28
    %v31 = vunpack.c.2.s8 %v28
    %v32 = vunpack.c.3.s8 %v28
    %33 = vst [vmem:[#allocation1] sm:%s5] %v29
    %v34 = vld [vmem:[#allocation1] sm:$0x3]
    %vm35 = vcmask 523264
    %36 = vst.msk [vmem:[#allocation0] sm:$0x3] %vm35, %v34
    %s37 = scalar_lea.vmem [#allocation1], 8
    %v38 = vld [vmem:[%s37] sm:$0x3]
    %vm39 = vcmask 523264
    %s40 = scalar_lea.vmem [#allocation0], 2
    %41 = vst.msk [vmem:[%s40] sm:$0x3] %vm39, %v38
    %s43 = smul.u32 1, 4
    %s44 = sshll.u32 1, %s43
    %s45 = ssub.s32 %s44, 1
    %s46 = sshrl.u32 %s43, 2
    %v47 = vld [vmem:[#allocation0] sm:%s45]
    %s48 = sshll.u32 1, %s46
    %s49 = ssub.s32 %s48, 1
    %v50 = vpack.c.b16 0, %v47
    %v51 = vpack.c.b8 0, %v50
    %52 = vst [vmem:[%s1] sm:%s49] %v51

// kernel: patch_loss.3
$region0: #{patch_loss.3}
  #allocation0 [shape = 'u32[]', space=smem, size = 0x4, offset = 0x4, fixed_abs, tag = 'smem constant byte address 0x4 - core index']
  #allocation1 [shape = 'u32[144,128]{1,0:T(1,128)}', space=vmem, size = 0x12000, scoped, tag = 'internal scratch']
  %s0 = inlined_call_operand.vmem [shape: f32[4,4,32], index: 0, kind: input, shape index: {}]
  %s1 = inlined_call_operand.vmem [shape: f32[4,1,32], index: 1, kind: input, shape index: {}]
  %s2 = inlined_call_operand.vmem [shape: f32[4,1,4], index: 2, kind: input, shape index: {}]
  %s3 = inlined_call_operand.vmem [shape: f32[4,1,128], index: 3, kind: output, shape index: {0}]
  %s4 = inlined_call_operand.vmem [shape: f32[4,1,128], index: 4, kind: output, shape index: {1}]
  %s5 = inlined_call_operand.vmem [shape: f32[4,1,4], index: 5, kind: output, shape index: {2}]
  %6 = xla_tuple %s3, %s4, %s5
  %s7 = sld [smem:[#allocation0]]
  $region65: #{patch_loss.3} parent=0
    _
  %s9 = ssub.s32 1, %s7
  %s10 = scalar_select 0, %s9, %s7
  loop: start=0, step=1, limit=6
  $region2: #{patch_loss.3} parent=0 // loop_pre_header
    _
  $region3: #{patch_loss.3} parent=0 // loop_header
    %s12 = sphi 0, %s16
    %p13 = scmp.ge.s32.totalorder %s12, 6
    %s19 = sphi 0, %s31
    %s20 = sphi 0, %s27
    %s21 = sphi 0, %s19
    %s22 = sphi 0, %s20
    %s23 = sphi 0, %s21
    %s24 = sphi 0, %s22
    %s36 = sphi 0, %s38
    %s39 = sphi 0, %s36
    %s40 = sphi 0, %s39
    %s56 = sphi 0, %s40
    %s62 = sphi 0, %s64
    %s65 = sphi 0, %s62
    %s66 = sphi 0, %s65
    %s82 = sphi 0, %s66
    %s90 = sphi 0, %s92
    %s93 = sphi 0, %s90
    %s94 = sphi 0, %s93
    %s110 = sphi 0, %s94
    %s116 = sphi 0, %s118
    %s119 = sphi 0, %s116
    %s120 = sphi 0, %s119
    %s136 = sphi 0, %s120
    %s142 = sphi 0, %s144
    %s145 = sphi 0, %s142
    %s146 = sphi 0, %s145
    %s162 = sphi 0, %s146
    %s170 = sphi 0, %s172
    %s173 = sphi 0, %s170
    %s174 = sphi 0, %s173
    %s190 = sphi 0, %s174
  $region4: #{patch_loss.3} parent=0 // loop_header_branch
    %15 = sbr.rel (%p13) target = $region8
  $region5: #{patch_loss.3} parent=0 // loop_body
    %s17 = ssub.s32 %s12, 1
    %s18 = ssub.s32 %s12, 2
    %s25 = sadd.s32 1, %s20
    %p26 = scmp.ge.s32.totalorder %s25, 1
    %s27 = scalar_select %p26, 0, %s25
    %s28 = sadd.s32 1, %s19
    %s29 = scalar_select %p26, %s28, %s19
    %p30 = scmp.ge.s32.totalorder %s29, 4
    %s31 = scalar_select %p30, 0, %s29
    %s32 = ssub.s32 %s19, %s31
    %s33 = ssub.s32 %s20, %s27
    %s34 = sor.u32 %s32, %s33
    %p35 = scmp.eq.s32.totalorder %s34, 0
    %s37 = sadd.s32 %s36, 1
    %s38 = scalar_select %p35, %s36, %s37
    %p41 = pneg %p35
    %p42 = scmp.eq.s32.totalorder %s12, 3
    %p43 = por %p41, %p42
    %p44 = scmp.ne.s32.totalorder %s36, %s39
    %p45 = scmp.eq.s32.totalorder %s12, 0
    %p46 = por %p44, %p45
    %p47 = scmp.ne.s32.totalorder %s36, %s39
    %p48 = scmp.eq.s32.totalorder %s17, 3
    %p49 = por %p47, %p48
    %p50 = scmp.ne.s32.totalorder %s39, %s40
    %p51 = scmp.eq.s32.totalorder %s17, 0
    %p52 = por %p50, %p51
    %p53 = scmp.ne.s32.totalorder %s39, %s40
    %p54 = scmp.eq.s32.totalorder %s18, 3
    %p55 = por %p53, %p54
    %p57 = scmp.ne.s32.totalorder %s40, %s56
    %p58 = scmp.eq.s32.totalorder %s18, 0
    %p59 = por %p57, %p58
    %s60 = ssub.s32 %s19, %s31
    %p61 = scmp.eq.s32.totalorder %s60, 0
    %s63 = sadd.s32 %s62, 1
    %s64 = scalar_select %p61, %s62, %s63
    %p67 = pneg %p61
    %p68 = scmp.eq.s32.totalorder %s12, 3
    %p69 = por %p67, %p68
    %p70 = scmp.ne.s32.totalorder %s62, %s65
    %p71 = scmp.eq.s32.totalorder %s12, 0
    %p72 = por %p70, %p71
    %p73 = scmp.ne.s32.totalorder %s62, %s65
    %p74 = scmp.eq.s32.totalorder %s17, 3
    %p75 = por %p73, %p74
    %p76 = scmp.ne.s32.totalorder %s65, %s66
    %p77 = scmp.eq.s32.totalorder %s17, 0
    %p78 = por %p76, %p77
    %p79 = scmp.ne.s32.totalorder %s65, %s66
    %p80 = scmp.eq.s32.totalorder %s18, 3
    %p81 = por %p79, %p80
    %p83 = scmp.ne.s32.totalorder %s66, %s82
    %p84 = scmp.eq.s32.totalorder %s18, 0
    %p85 = por %p83, %p84
    %s86 = ssub.s32 %s19, %s31
    %s87 = ssub.s32 %s20, %s27
    %s88 = sor.u32 %s86, %s87
    %p89 = scmp.eq.s32.totalorder %s88, 0
    %s91 = sadd.s32 %s90, 1
    %s92 = scalar_select %p89, %s90, %s91
    %p95 = pneg %p89
    %p96 = scmp.eq.s32.totalorder %s12, 3
    %p97 = por %p95, %p96
    %p98 = scmp.ne.s32.totalorder %s90, %s93
    %p99 = scmp.eq.s32.totalorder %s12, 0
    %p100 = por %p98, %p99
    %p101 = scmp.ne.s32.totalorder %s90, %s93
    %p102 = scmp.eq.s32.totalorder %s17, 3
    %p103 = por %p101, %p102
    %p104 = scmp.ne.s32.totalorder %s93, %s94
    %p105 = scmp.eq.s32.totalorder %s17, 0
    %p106 = por %p104, %p105
    %p107 = scmp.ne.s32.totalorder %s93, %s94
    %p108 = scmp.eq.s32.totalorder %s18, 3
    %p109 = por %p107, %p108
    %p111 = scmp.ne.s32.totalorder %s94, %s110
    %p112 = scmp.eq.s32.totalorder %s18, 0
    %p113 = por %p111, %p112
    %s114 = ssub.s32 %s19, %s31
    %p115 = scmp.eq.s32.totalorder %s114, 0
    %s117 = sadd.s32 %s116, 1
    %s118 = scalar_select %p115, %s116, %s117
    %p121 = pneg %p115
    %p122 = scmp.eq.s32.totalorder %s12, 3
    %p123 = por %p121, %p122
    %p124 = scmp.ne.s32.totalorder %s116, %s119
    %p125 = scmp.eq.s32.totalorder %s12, 0
    %p126 = por %p124, %p125
    %p127 = scmp.ne.s32.totalorder %s116, %s119
    %p128 = scmp.eq.s32.totalorder %s17, 3
    %p129 = por %p127, %p128
    %p130 = scmp.ne.s32.totalorder %s119, %s120
    %p131 = scmp.eq.s32.totalorder %s17, 0
    %p132 = por %p130, %p131
    %p133 = scmp.ne.s32.totalorder %s119, %s120
    %p134 = scmp.eq.s32.totalorder %s18, 3
    %p135 = por %p133, %p134
    %p137 = scmp.ne.s32.totalorder %s120, %s136
    %p138 = scmp.eq.s32.totalorder %s18, 0
    %p139 = por %p137, %p138
    %s140 = ssub.s32 %s19, %s31
    %p141 = scmp.eq.s32.totalorder %s140, 0
    %s143 = sadd.s32 %s142, 1
    %s144 = scalar_select %p141, %s142, %s143
    %p147 = pneg %p141
    %p148 = scmp.eq.s32.totalorder %s12, 3
    %p149 = por %p147, %p148
    %p150 = scmp.ne.s32.totalorder %s142, %s145
    %p151 = scmp.eq.s32.totalorder %s12, 0
    %p152 = por %p150, %p151
    %p153 = scmp.ne.s32.totalorder %s142, %s145
    %p154 = scmp.eq.s32.totalorder %s17, 3
    %p155 = por %p153, %p154
    %p156 = scmp.ne.s32.totalorder %s145, %s146
    %p157 = scmp.eq.s32.totalorder %s17, 0
    %p158 = por %p156, %p157
    %p159 = scmp.ne.s32.totalorder %s145, %s146
    %p160 = scmp.eq.s32.totalorder %s18, 3
    %p161 = por %p159, %p160
    %p163 = scmp.ne.s32.totalorder %s146, %s162
    %p164 = scmp.eq.s32.totalorder %s18, 0
    %p165 = por %p163, %p164
    %s166 = ssub.s32 %s19, %s31
    %s167 = ssub.s32 %s20, %s27
    %s168 = sor.u32 %s166, %s167
    %p169 = scmp.eq.s32.totalorder %s168, 0
    %s171 = sadd.s32 %s170, 1
    %s172 = scalar_select %p169, %s170, %s171
    %p175 = pneg %p169
    %p176 = scmp.eq.s32.totalorder %s12, 3
    %p177 = por %p175, %p176
    %p178 = scmp.ne.s32.totalorder %s170, %s173
    %p179 = scmp.eq.s32.totalorder %s12, 0
    %p180 = por %p178, %p179
    %p181 = scmp.ne.s32.totalorder %s170, %s173
    %p182 = scmp.eq.s32.totalorder %s17, 3
    %p183 = por %p181, %p182
    %p184 = scmp.ne.s32.totalorder %s173, %s174
    %p185 = scmp.eq.s32.totalorder %s17, 0
    %p186 = por %p184, %p185
    %p187 = scmp.ne.s32.totalorder %s173, %s174
    %p188 = scmp.eq.s32.totalorder %s18, 3
    %p189 = por %p187, %p188
    %p191 = scmp.ne.s32.totalorder %s174, %s190
    %p192 = scmp.eq.s32.totalorder %s18, 0
    %p193 = por %p191, %p192
    %p194 = scmp.le.s32.totalorder 1, %s12
    %p195 = scmp.lt.s32.totalorder %s12, 5
    %p196 = pnand %p194, %p195
    %p197 = pneg %p196
    // Predicated region
    $region9: #{patch_loss.3} parent=5 // pred_check
      _
    $region10: #{patch_loss.3} parent=5 // pred_check_branch
      %199 = sbr.rel (%p196) target = $region12
    $region11: #{patch_loss.3} parent=5 // pred_region
      %s200 = ssub.s32 %s12, 1
    $region12: #{patch_loss.3} parent=5 // pred_fallthru
      _
    %p201 = scmp.lt.s32.totalorder %s12, 4
    // Predicated region
    $region13: #{patch_loss.3} parent=5 // pred_check
      %p202 = pneg %p201
    $region14: #{patch_loss.3} parent=5 // pred_check_branch
      %204 = sbr.rel (%p202) target = $region16
    $region15: #{patch_loss.3} parent=5 // pred_region
      // Predicated region
      $region17: #{patch_loss.3} parent=15 // pred_check
        %p205 = pneg %p46
      $region18: #{patch_loss.3} parent=15 // pred_check_branch
        %207 = sbr.rel (%p205) target = $region20
      $region19: #{patch_loss.3} parent=15 // pred_region
        %p208 = scmp.lt.s32.totalorder %s19, 3
        %s209 = scalar_select %p208, %s19, 3
        %p210 = scmp.lt.s32.totalorder %s20, 0
        %s211 = scalar_select %p210, %s20, 0
        %s212 = sadd.s32 %s211, %s209
        %s213 = smul.addr %s212, 4
        %s214 = scalar_lea.vmem %s0, %s213
      $region20: #{patch_loss.3} parent=15 // pred_fallthru
        _
      // Predicated region
      $region21: #{patch_loss.3} parent=15 // pred_check
        %p215 = pneg %p72
      $region22: #{patch_loss.3} parent=15 // pred_check_branch
        %217 = sbr.rel (%p215) target = $region24
      $region23: #{patch_loss.3} parent=15 // pred_region
        %p218 = scmp.lt.s32.totalorder %s19, 3
        %s219 = scalar_select %p218, %s19, 3
        %s220 = scalar_lea.vmem %s1, %s219
      $region24: #{patch_loss.3} parent=15 // pred_fallthru
        _
      // Predicated region
      $region25: #{patch_loss.3} parent=15 // pred_check
        %p221 = pneg %p100
      $region26: #{patch_loss.3} parent=15 // pred_check_branch
        %223 = sbr.rel (%p221) target = $region28
      $region27: #{patch_loss.3} parent=15 // pred_region
        %p224 = scmp.lt.s32.totalorder %s19, 3
        %s225 = scalar_select %p224, %s19, 3
        %p226 = scmp.lt.s32.totalorder %s20, 0
        %s227 = scalar_select %p226, %s20, 0
        %s228 = sadd.s32 %s227, %s225
        %s229 = scalar_lea.vmem %s2, %s228
      $region28: #{patch_loss.3} parent=15 // pred_fallthru
        _
    $region16: #{patch_loss.3} parent=5 // pred_fallthru
      _
    %p230 = scmp.le.s32.totalorder 1, %s12
    %p231 = scmp.lt.s32.totalorder %s12, 5
    %p232 = pnand %p230, %p231
    %p233 = pneg %p232
    // Predicated region
    $region29: #{patch_loss.3} parent=5 // pred_check
      _
    $region30: #{patch_loss.3} parent=5 // pred_check_branch
      %235 = sbr.rel (%p232) target = $region32
    $region31: #{patch_loss.3} parent=5 // pred_region
      %s236 = ssub.s32 %s12, 1
      %p237 = scmp.lt.s32.totalorder %s21, 3
      %s238 = scalar_select %p237, %s21, 3
      %p239 = scmp.lt.s32.totalorder %s22, 0
      %s240 = scalar_select %p239, %s22, 0
      %s241 = sadd.s32 %s240, %s238
      %s242 = smul.addr %s241, 4
      %s243 = scalar_lea.vmem %s0, %s242
      %p244 = pneg %p52
      %p245 = pneg %p49
      %p246 = scmp.lt.s32.totalorder %s21, 3
      %s247 = scalar_select %p246, %s21, 3
      %s248 = scalar_lea.vmem %s1, %s247
      %p249 = pneg %p78
      %p250 = pneg %p75
      %p251 = scmp.lt.s32.totalorder %s21, 3
      %s252 = scalar_select %p251, %s21, 3
      %p253 = scmp.lt.s32.totalorder %s22, 0
      %s254 = scalar_select %p253, %s22, 0
      %s255 = sadd.s32 %s254, %s252
      %s256 = scalar_lea.vmem %s2, %s255
      %p257 = pneg %p106
      %p258 = pneg %p103
      %p259 = pneg %p132
      %p260 = pneg %p129
      %p261 = scmp.lt.s32.totalorder %s21, 3
      %s262 = scalar_select %p261, %s21, 3
      %s263 = scalar_lea.vmem %s3, %s262
      %p264 = pneg %p158
      %p265 = pneg %p155
      %p266 = scmp.lt.s32.totalorder %s21, 3
      %s267 = scalar_select %p266, %s21, 3
      %s268 = scalar_lea.vmem %s4, %s267
      %p269 = pneg %p186
      %p270 = pneg %p183
      %p271 = scmp.lt.s32.totalorder %s21, 3
      %s272 = scalar_select %p271, %s21, 3
      %p273 = scmp.lt.s32.totalorder %s22, 0
      %s274 = scalar_select %p273, %s22, 0
      %s275 = sadd.s32 %s274, %s272
      %s276 = scalar_lea.vmem %s5, %s275
      %p277 = scmp.lt.s32.totalorder %s21, 3
      %s278 = scalar_select %p277, %s21, 3
      %p279 = scmp.lt.s32.totalorder %s22, 0
      %s280 = scalar_select %p279, %s22, 0
      %s281 = sadd.s32 %s280, %s278
      %s282 = smul.addr %s281, 4
      %s283 = scalar_lea.vmem %s0, %s282
      %p284 = scmp.lt.s32.totalorder %s21, 3
      %s285 = scalar_select %p284, %s21, 3
      %s286 = scalar_lea.vmem %s1, %s285
      %p287 = scmp.lt.s32.totalorder %s21, 3
      %s288 = scalar_select %p287, %s21, 3
      %p289 = scmp.lt.s32.totalorder %s22, 0
      %s290 = scalar_select %p289, %s22, 0
      %s291 = sadd.s32 %s290, %s288
      %s292 = scalar_lea.vmem %s2, %s291
      %p293 = scmp.lt.s32.totalorder %s21, 3
      %s294 = scalar_select %p293, %s21, 3
      %s295 = scalar_lea.vmem %s3, %s294
      %p296 = scmp.lt.s32.totalorder %s21, 3
      %s297 = scalar_select %p296, %s21, 3
      %s298 = scalar_lea.vmem %s4, %s297
      %p299 = scmp.lt.s32.totalorder %s21, 3
      %s300 = scalar_select %p299, %s21, 3
      %p301 = scmp.lt.s32.totalorder %s22, 0
      %s302 = scalar_select %p301, %s22, 0
      %s303 = sadd.s32 %s302, %s300
      %s304 = scalar_lea.vmem %s5, %s303
      %p305 = scmp.eq.s32.totalorder %s22, 0
      // Predicated region
      $region33: #{patch_loss.3} parent=31 // pred_check
        %p306 = pneg %p305
      $region34: #{patch_loss.3} parent=31 // pred_check_branch
        %308 = sbr.rel (%p306) target = $region36
      $region35: #{patch_loss.3} parent=31 // pred_region
        %309 = vst [vmem:[%s295] sm:$0x1] 0.0
        %310 = vst [vmem:[%s298] sm:$0x1] 0.0
      $region36: #{patch_loss.3} parent=31 // pred_fallthru
        _
      %v311 = vld [vmem:[%s283] sm:$0xf]
      %v312 = vld [vmem:[%s286] sm:$0x1]
      %s313 = smul.u32 %s22, 4
      %v314 = vlaneseq
      %v315 = vand.u32 %v314, 127
      %v316 = vstv %s313
      %v317 = vadd.s32 %v316, %v315
      %vm318 = vcmp.lt.s32.totalorder %v317, 4
      %v320 = vlaneseq
      %v321 = vshrl.u32 %v320, 7
      %v322 = vsub.s32 0, %v321
      %v323 = vrot.slane %v312, %v322
      %v325 = vsub.f32 %v311, %v323
      %v326 = vmul.f32 %v325, %v325
      %vm327 = vcmask 257024
      %v328 = vsel %vm327, %v326, 0.0
      %329 = vadd.xlane.f32.xlu0 %v328
      %v330 = vpop.xlane.xlu0 %329
      %v332 = vlaneseq
      %v333 = vshrl.u32 %v332, 7
      %v334 = vsub.s32 %v315, %v333
      %v335 = vrot.slane %v330, %v334
      %v337 = vsel %vm318, %v335, 0.0
      %v338 = vrsqrt.pop %v337
      %v339 = vmul.f32 %v337, %v338
      %vm340 = vcmp.eq.f32.partialorder %v337, inf
      %v341 = vsel %vm340, %v337, %v339
      %vm342 = vcmp.eq.f32.partialorder %v337, 0.0
      %v343 = vand.u32 %v337, 2147483648
      %v344 = vsel %vm342, %v343, %v341
      %v345 = vand.u32 2147483647, %v311
      %v346 = vsel %vm327, %v345, 0.0
      %347 = vadd.xlane.f32.xlu0 %v346
      %v348 = vpop.xlane.xlu0 %347
      %v350 = vlaneseq
      %v351 = vshrl.u32 %v350, 7
      %v352 = vsub.s32 %v315, %v351
      %v353 = vrot.slane %v348, %v352
      %v355 = vsel %vm318, %v353, 0.0
      %vm356 = vcmask 24576
      %357 = vst.msk [vmem:[%s304] sm:$0x1] %vm356, %v355
      %v358 = vld [vmem:[%s292] sm:$0x1]
      %v359 = vld [vmem:[%s295] sm:$0x1]
      %v360 = vmul.f32 %v358, %v344
      %v361 = vsel %vm356, %v360, 0.0
      %362 = vadd.xlane.f32.xlu0 %v361
      %v363 = vpop.xlane.xlu0 %362
      %v364 = vrot.slane %v363, 4
      %v365 = vadd.f32 %v363, %v364
      %v366 = vrot.slane %v365, 2
      %v367 = vadd.f32 %v365, %v366
      %v368 = vrot.slane %v367, 1
      %v369 = vadd.f32 %v367, %v368
      %s370 = vtos %v369
      %v371 = vstv %s370
      %v372 = vadd.f32 %v359, %v371
      %373 = vst [vmem:[%s295] sm:$0x1] %v372
      %v374 = vld [vmem:[%s298] sm:$0x1]
      %v375 = vsel %vm356, %v344, 0.0
      %376 = vadd.xlane.f32.xlu0 %v375
      %v377 = vpop.xlane.xlu0 %376
      %v378 = vrot.slane %v377, 4
      %v379 = vadd.f32 %v377, %v378
      %v380 = vrot.slane %v379, 2
      %v381 = vadd.f32 %v379, %v380
      %v382 = vrot.slane %v381, 1
      %v383 = vadd.f32 %v381, %v382
      %s384 = vtos %v383
      %v385 = vstv %s384
      %v386 = vadd.f32 %v374, %v385
      %387 = vst [vmem:[%s298] sm:$0x1] %v386
      %p388 = scmp.lt.s32.totalorder %s21, 3
      %s389 = scalar_select %p388, %s21, 3
      %s390 = scalar_lea.vmem %s3, %s389
      %p391 = scmp.lt.s32.totalorder %s21, 3
      %s392 = scalar_select %p391, %s21, 3
      %s393 = scalar_lea.vmem %s4, %s392
      %p394 = scmp.lt.s32.totalorder %s21, 3
      %s395 = scalar_select %p394, %s21, 3
      %p396 = scmp.lt.s32.totalorder %s22, 0
      %s397 = scalar_select %p396, %s22, 0
      %s398 = sadd.s32 %s397, %s395
      %s399 = scalar_lea.vmem %s5, %s398
      // Predicated region
      $region37: #{patch_loss.3} parent=31 // pred_check
        %p400 = pneg %p129
      $region38: #{patch_loss.3} parent=31 // pred_check_branch
        %402 = sbr.rel (%p400) target = $region40
      $region39: #{patch_loss.3} parent=31 // pred_region
        _
      $region40: #{patch_loss.3} parent=31 // pred_fallthru
        _
      // Predicated region
      $region41: #{patch_loss.3} parent=31 // pred_check
        %p403 = pneg %p155
      $region42: #{patch_loss.3} parent=31 // pred_check_branch
        %405 = sbr.rel (%p403) target = $region44
      $region43: #{patch_loss.3} parent=31 // pred_region
        _
      $region44: #{patch_loss.3} parent=31 // pred_fallthru
        _
      // Predicated region
      $region45: #{patch_loss.3} parent=31 // pred_check
        %p406 = pneg %p183
      $region46: #{patch_loss.3} parent=31 // pred_check_branch
        %408 = sbr.rel (%p406) target = $region48
      $region47: #{patch_loss.3} parent=31 // pred_region
        _
      $region48: #{patch_loss.3} parent=31 // pred_fallthru
        _
    $region32: #{patch_loss.3} parent=5 // pred_fallthru
      _
    %p409 = scmp.le.s32.totalorder 2, %s12
    // Predicated region
    $region49: #{patch_loss.3} parent=5 // pred_check
      %p410 = pneg %p409
    $region50: #{patch_loss.3} parent=5 // pred_check_branch
      %412 = sbr.rel (%p410) target = $region52
    $region51: #{patch_loss.3} parent=5 // pred_region
      %s413 = ssub.s32 %s12, 2
      // Predicated region
      $region53: #{patch_loss.3} parent=51 // pred_check
        %p414 = pneg %p135
      $region54: #{patch_loss.3} parent=51 // pred_check_branch
        %416 = sbr.rel (%p414) target = $region56
      $region55: #{patch_loss.3} parent=51 // pred_region
        %p417 = scmp.lt.s32.totalorder %s23, 3
        %s418 = scalar_select %p417, %s23, 3
        %s419 = scalar_lea.vmem %s3, %s418
      $region56: #{patch_loss.3} parent=51 // pred_fallthru
        _
      // Predicated region
      $region57: #{patch_loss.3} parent=51 // pred_check
        %p420 = pneg %p161
      $region58: #{patch_loss.3} parent=51 // pred_check_branch
        %422 = sbr.rel (%p420) target = $region60
      $region59: #{patch_loss.3} parent=51 // pred_region
        %p423 = scmp.lt.s32.totalorder %s23, 3
        %s424 = scalar_select %p423, %s23, 3
        %s425 = scalar_lea.vmem %s4, %s424
      $region60: #{patch_loss.3} parent=51 // pred_fallthru
        _
      // Predicated region
      $region61: #{patch_loss.3} parent=51 // pred_check
        %p426 = pneg %p189
      $region62: #{patch_loss.3} parent=51 // pred_check_branch
        %428 = sbr.rel (%p426) target = $region64
      $region63: #{patch_loss.3} parent=51 // pred_region
        %p429 = scmp.lt.s32.totalorder %s23, 3
        %s430 = scalar_select %p429, %s23, 3
        %p431 = scmp.lt.s32.totalorder %s24, 0
        %s432 = scalar_select %p431, %s24, 0
        %s433 = sadd.s32 %s432, %s430
        %s434 = scalar_lea.vmem %s5, %s433
      $region64: #{patch_loss.3} parent=51 // pred_fallthru
        _
    $region52: #{patch_loss.3} parent=5 // pred_fallthru
      _
  $region6: #{patch_loss.3} parent=0 // loop_footer
    %s16 = sadd.s32 1, %s12
  $region7: #{patch_loss.3} parent=0 // loop_footer_branch
    %11 = sbr.rel target = $region3
  $region8: #{patch_loss.3} parent=0 // loop_exit
    _

// kernel: patch_loss.2
$region0: #{patch_loss.2}
  #allocation0 [shape = 'u32[]', space=smem, size = 0x4, offset = 0x4, fixed_abs, tag = 'smem constant byte address 0x4 - core index']
  #allocation1 [shape = 'u32[144,128]{1,0:T(1,128)}', space=vmem, size = 0x12000, scoped, tag = 'internal scratch']
  %s0 = inlined_call_operand.vmem [shape: f32[4,64,32], index: 0, kind: input, shape index: {}]
  %s1 = inlined_call_operand.vmem [shape: f32[4,1,32], index: 1, kind: input, shape index: {}]
  %s2 = inlined_call_operand.vmem [shape: f32[4,1,64], index: 2, kind: input, shape index: {}]
  %s3 = inlined_call_operand.vmem [shape: f32[4,1,128], index: 3, kind: output, shape index: {0}]
  %s4 = inlined_call_operand.vmem [shape: f32[4,1,128], index: 4, kind: output, shape index: {1}]
  %s5 = inlined_call_operand.vmem [shape: f32[4,1,64], index: 5, kind: output, shape index: {2}]
  %6 = xla_tuple %s3, %s4, %s5
  %s7 = sld [smem:[#allocation0]]
  $region65: #{patch_loss.2} parent=0
    _
  %s9 = ssub.s32 1, %s7
  %s10 = scalar_select 0, %s9, %s7
  loop: start=0, step=1, limit=6
  $region2: #{patch_loss.2} parent=0 // loop_pre_header
    _
  $region3: #{patch_loss.2} parent=0 // loop_header
    %s12 = sphi 0, %s16
    %p13 = scmp.ge.s32.totalorder %s12, 6
    %s19 = sphi 0, %s31
    %s20 = sphi 0, %s27
    %s21 = sphi 0, %s19
    %s22 = sphi 0, %s20
    %s23 = sphi 0, %s21
    %s24 = sphi 0, %s22
    %s36 = sphi 0, %s38
    %s39 = sphi 0, %s36
    %s40 = sphi 0, %s39
    %s56 = sphi 0, %s40
    %s62 = sphi 0, %s64
    %s65 = sphi 0, %s62
    %s66 = sphi 0, %s65
    %s82 = sphi 0, %s66
    %s90 = sphi 0, %s92
    %s93 = sphi 0, %s90
    %s94 = sphi 0, %s93
    %s110 = sphi 0, %s94
    %s116 = sphi 0, %s118
    %s119 = sphi 0, %s116
    %s120 = sphi 0, %s119
    %s136 = sphi 0, %s120
    %s142 = sphi 0, %s144
    %s145 = sphi 0, %s142
    %s146 = sphi 0, %s145
    %s162 = sphi 0, %s146
    %s170 = sphi 0, %s172
    %s173 = sphi 0, %s170
    %s174 = sphi 0, %s173
    %s190 = sphi 0, %s174
  $region4: #{patch_loss.2} parent=0 // loop_header_branch
    %15 = sbr.rel (%p13) target = $region8
  $region5: #{patch_loss.2} parent=0 // loop_body
    %s17 = ssub.s32 %s12, 1
    %s18 = ssub.s32 %s12, 2
    %s25 = sadd.s32 1, %s20
    %p26 = scmp.ge.s32.totalorder %s25, 1
    %s27 = scalar_select %p26, 0, %s25
    %s28 = sadd.s32 1, %s19
    %s29 = scalar_select %p26, %s28, %s19
    %p30 = scmp.ge.s32.totalorder %s29, 4
    %s31 = scalar_select %p30, 0, %s29
    %s32 = ssub.s32 %s19, %s31
    %s33 = ssub.s32 %s20, %s27
    %s34 = sor.u32 %s32, %s33
    %p35 = scmp.eq.s32.totalorder %s34, 0
    %s37 = sadd.s32 %s36, 1
    %s38 = scalar_select %p35, %s36, %s37
    %p41 = pneg %p35
    %p42 = scmp.eq.s32.totalorder %s12, 3
    %p43 = por %p41, %p42
    %p44 = scmp.ne.s32.totalorder %s36, %s39
    %p45 = scmp.eq.s32.totalorder %s12, 0
    %p46 = por %p44, %p45
    %p47 = scmp.ne.s32.totalorder %s36, %s39
    %p48 = scmp.eq.s32.totalorder %s17, 3
    %p49 = por %p47, %p48
    %p50 = scmp.ne.s32.totalorder %s39, %s40
    %p51 = scmp.eq.s32.totalorder %s17, 0
    %p52 = por %p50, %p51
    %p53 = scmp.ne.s32.totalorder %s39, %s40
    %p54 = scmp.eq.s32.totalorder %s18, 3
    %p55 = por %p53, %p54
    %p57 = scmp.ne.s32.totalorder %s40, %s56
    %p58 = scmp.eq.s32.totalorder %s18, 0
    %p59 = por %p57, %p58
    %s60 = ssub.s32 %s19, %s31
    %p61 = scmp.eq.s32.totalorder %s60, 0
    %s63 = sadd.s32 %s62, 1
    %s64 = scalar_select %p61, %s62, %s63
    %p67 = pneg %p61
    %p68 = scmp.eq.s32.totalorder %s12, 3
    %p69 = por %p67, %p68
    %p70 = scmp.ne.s32.totalorder %s62, %s65
    %p71 = scmp.eq.s32.totalorder %s12, 0
    %p72 = por %p70, %p71
    %p73 = scmp.ne.s32.totalorder %s62, %s65
    %p74 = scmp.eq.s32.totalorder %s17, 3
    %p75 = por %p73, %p74
    %p76 = scmp.ne.s32.totalorder %s65, %s66
    %p77 = scmp.eq.s32.totalorder %s17, 0
    %p78 = por %p76, %p77
    %p79 = scmp.ne.s32.totalorder %s65, %s66
    %p80 = scmp.eq.s32.totalorder %s18, 3
    %p81 = por %p79, %p80
    %p83 = scmp.ne.s32.totalorder %s66, %s82
    %p84 = scmp.eq.s32.totalorder %s18, 0
    %p85 = por %p83, %p84
    %s86 = ssub.s32 %s19, %s31
    %s87 = ssub.s32 %s20, %s27
    %s88 = sor.u32 %s86, %s87
    %p89 = scmp.eq.s32.totalorder %s88, 0
    %s91 = sadd.s32 %s90, 1
    %s92 = scalar_select %p89, %s90, %s91
    %p95 = pneg %p89
    %p96 = scmp.eq.s32.totalorder %s12, 3
    %p97 = por %p95, %p96
    %p98 = scmp.ne.s32.totalorder %s90, %s93
    %p99 = scmp.eq.s32.totalorder %s12, 0
    %p100 = por %p98, %p99
    %p101 = scmp.ne.s32.totalorder %s90, %s93
    %p102 = scmp.eq.s32.totalorder %s17, 3
    %p103 = por %p101, %p102
    %p104 = scmp.ne.s32.totalorder %s93, %s94
    %p105 = scmp.eq.s32.totalorder %s17, 0
    %p106 = por %p104, %p105
    %p107 = scmp.ne.s32.totalorder %s93, %s94
    %p108 = scmp.eq.s32.totalorder %s18, 3
    %p109 = por %p107, %p108
    %p111 = scmp.ne.s32.totalorder %s94, %s110
    %p112 = scmp.eq.s32.totalorder %s18, 0
    %p113 = por %p111, %p112
    %s114 = ssub.s32 %s19, %s31
    %p115 = scmp.eq.s32.totalorder %s114, 0
    %s117 = sadd.s32 %s116, 1
    %s118 = scalar_select %p115, %s116, %s117
    %p121 = pneg %p115
    %p122 = scmp.eq.s32.totalorder %s12, 3
    %p123 = por %p121, %p122
    %p124 = scmp.ne.s32.totalorder %s116, %s119
    %p125 = scmp.eq.s32.totalorder %s12, 0
    %p126 = por %p124, %p125
    %p127 = scmp.ne.s32.totalorder %s116, %s119
    %p128 = scmp.eq.s32.totalorder %s17, 3
    %p129 = por %p127, %p128
    %p130 = scmp.ne.s32.totalorder %s119, %s120
    %p131 = scmp.eq.s32.totalorder %s17, 0
    %p132 = por %p130, %p131
    %p133 = scmp.ne.s32.totalorder %s119, %s120
    %p134 = scmp.eq.s32.totalorder %s18, 3
    %p135 = por %p133, %p134
    %p137 = scmp.ne.s32.totalorder %s120, %s136
    %p138 = scmp.eq.s32.totalorder %s18, 0
    %p139 = por %p137, %p138
    %s140 = ssub.s32 %s19, %s31
    %p141 = scmp.eq.s32.totalorder %s140, 0
    %s143 = sadd.s32 %s142, 1
    %s144 = scalar_select %p141, %s142, %s143
    %p147 = pneg %p141
    %p148 = scmp.eq.s32.totalorder %s12, 3
    %p149 = por %p147, %p148
    %p150 = scmp.ne.s32.totalorder %s142, %s145
    %p151 = scmp.eq.s32.totalorder %s12, 0
    %p152 = por %p150, %p151
    %p153 = scmp.ne.s32.totalorder %s142, %s145
    %p154 = scmp.eq.s32.totalorder %s17, 3
    %p155 = por %p153, %p154
    %p156 = scmp.ne.s32.totalorder %s145, %s146
    %p157 = scmp.eq.s32.totalorder %s17, 0
    %p158 = por %p156, %p157
    %p159 = scmp.ne.s32.totalorder %s145, %s146
    %p160 = scmp.eq.s32.totalorder %s18, 3
    %p161 = por %p159, %p160
    %p163 = scmp.ne.s32.totalorder %s146, %s162
    %p164 = scmp.eq.s32.totalorder %s18, 0
    %p165 = por %p163, %p164
    %s166 = ssub.s32 %s19, %s31
    %s167 = ssub.s32 %s20, %s27
    %s168 = sor.u32 %s166, %s167
    %p169 = scmp.eq.s32.totalorder %s168, 0
    %s171 = sadd.s32 %s170, 1
    %s172 = scalar_select %p169, %s170, %s171
    %p175 = pneg %p169
    %p176 = scmp.eq.s32.totalorder %s12, 3
    %p177 = por %p175, %p176
    %p178 = scmp.ne.s32.totalorder %s170, %s173
    %p179 = scmp.eq.s32.totalorder %s12, 0
    %p180 = por %p178, %p179
    %p181 = scmp.ne.s32.totalorder %s170, %s173
    %p182 = scmp.eq.s32.totalorder %s17, 3
    %p183 = por %p181, %p182
    %p184 = scmp.ne.s32.totalorder %s173, %s174
    %p185 = scmp.eq.s32.totalorder %s17, 0
    %p186 = por %p184, %p185
    %p187 = scmp.ne.s32.totalorder %s173, %s174
    %p188 = scmp.eq.s32.totalorder %s18, 3
    %p189 = por %p187, %p188
    %p191 = scmp.ne.s32.totalorder %s174, %s190
    %p192 = scmp.eq.s32.totalorder %s18, 0
    %p193 = por %p191, %p192
    %p194 = scmp.le.s32.totalorder 1, %s12
    %p195 = scmp.lt.s32.totalorder %s12, 5
    %p196 = pnand %p194, %p195
    %p197 = pneg %p196
    // Predicated region
    $region9: #{patch_loss.2} parent=5 // pred_check
      _
    $region10: #{patch_loss.2} parent=5 // pred_check_branch
      %199 = sbr.rel (%p196) target = $region12
    $region11: #{patch_loss.2} parent=5 // pred_region
      %s200 = ssub.s32 %s12, 1
    $region12: #{patch_loss.2} parent=5 // pred_fallthru
      _
    %p201 = scmp.lt.s32.totalorder %s12, 4
    // Predicated region
    $region13: #{patch_loss.2} parent=5 // pred_check
      %p202 = pneg %p201
    $region14: #{patch_loss.2} parent=5 // pred_check_branch
      %204 = sbr.rel (%p202) target = $region16
    $region15: #{patch_loss.2} parent=5 // pred_region
      // Predicated region
      $region17: #{patch_loss.2} parent=15 // pred_check
        %p205 = pneg %p46
      $region18: #{patch_loss.2} parent=15 // pred_check_branch
        %207 = sbr.rel (%p205) target = $region20
      $region19: #{patch_loss.2} parent=15 // pred_region
        %s208 = smul.u32 8, %s20
        %p209 = scmp.lt.s32.totalorder %s19, 3
        %s210 = scalar_select %p209, %s19, 3
        %p211 = scmp.lt.s32.totalorder %s208, 7
        %s212 = scalar_select %p211, %s208, 7
        %s213 = smul.addr %s210, 8
        %s214 = sadd.s32 %s212, %s213
        %s215 = smul.addr %s214, 8
        %s216 = scalar_lea.vmem %s0, %s215
        %s217 = smul.u32 8, %s20
      $region20: #{patch_loss.2} parent=15 // pred_fallthru
        _
      // Predicated region
      $region21: #{patch_loss.2} parent=15 // pred_check
        %p218 = pneg %p72
      $region22: #{patch_loss.2} parent=15 // pred_check_branch
        %220 = sbr.rel (%p218) target = $region24
      $region23: #{patch_loss.2} parent=15 // pred_region
        %p221 = scmp.lt.s32.totalorder %s19, 3
        %s222 = scalar_select %p221, %s19, 3
        %s223 = scalar_lea.vmem %s1, %s222
      $region24: #{patch_loss.2} parent=15 // pred_fallthru
        _
      // Predicated region
      $region25: #{patch_loss.2} parent=15 // pred_check
        %p224 = pneg %p100
      $region26: #{patch_loss.2} parent=15 // pred_check_branch
        %226 = sbr.rel (%p224) target = $region28
      $region27: #{patch_loss.2} parent=15 // pred_region
        %p227 = scmp.lt.s32.totalorder %s19, 3
        %s228 = scalar_select %p227, %s19, 3
        %p229 = scmp.lt.s32.totalorder %s20, 0
        %s230 = scalar_select %p229, %s20, 0
        %s231 = sadd.s32 %s230, %s228
        %s232 = scalar_lea.vmem %s2, %s231
      $region28: #{patch_loss.2} parent=15 // pred_fallthru
        _
    $region16: #{patch_loss.2} parent=5 // pred_fallthru
      _
    %p233 = scmp.le.s32.totalorder 1, %s12
    %p234 = scmp.lt.s32.totalorder %s12, 5
    %p235 = pnand %p233, %p234
    %p236 = pneg %p235
    // Predicated region
    $region29: #{patch_loss.2} parent=5 // pred_check
      _
    $region30: #{patch_loss.2} parent=5 // pred_check_branch
      %238 = sbr.rel (%p235) target = $region32
    $region31: #{patch_loss.2} parent=5 // pred_region
      %s239 = ssub.s32 %s12, 1
      %s240 = smul.u32 8, %s22
      %p241 = scmp.lt.s32.totalorder %s21, 3
      %s242 = scalar_select %p241, %s21, 3
      %p243 = scmp.lt.s32.totalorder %s240, 7
      %s244 = scalar_select %p243, %s240, 7
      %s245 = smul.addr %s242, 8
      %s246 = sadd.s32 %s244, %s245
      %s247 = smul.addr %s246, 8
      %s248 = scalar_lea.vmem %s0, %s247
      %p249 = pneg %p52
      %p250 = pneg %p49
      %p251 = scmp.lt.s32.totalorder %s21, 3
      %s252 = scalar_select %p251, %s21, 3
      %s253 = scalar_lea.vmem %s1, %s252
      %p254 = pneg %p78
      %p255 = pneg %p75
      %p256 = scmp.lt.s32.totalorder %s21, 3
      %s257 = scalar_select %p256, %s21, 3
      %p258 = scmp.lt.s32.totalorder %s22, 0
      %s259 = scalar_select %p258, %s22, 0
      %s260 = sadd.s32 %s259, %s257
      %s261 = scalar_lea.vmem %s2, %s260
      %p262 = pneg %p106
      %p263 = pneg %p103
      %p264 = pneg %p132
      %p265 = pneg %p129
      %p266 = scmp.lt.s32.totalorder %s21, 3
      %s267 = scalar_select %p266, %s21, 3
      %s268 = scalar_lea.vmem %s3, %s267
      %p269 = pneg %p158
      %p270 = pneg %p155
      %p271 = scmp.lt.s32.totalorder %s21, 3
      %s272 = scalar_select %p271, %s21, 3
      %s273 = scalar_lea.vmem %s4, %s272
      %p274 = pneg %p186
      %p275 = pneg %p183
      %p276 = scmp.lt.s32.totalorder %s21, 3
      %s277 = scalar_select %p276, %s21, 3
      %p278 = scmp.lt.s32.totalorder %s22, 0
      %s279 = scalar_select %p278, %s22, 0
      %s280 = sadd.s32 %s279, %s277
      %s281 = scalar_lea.vmem %s5, %s280
      %s282 = smul.u32 8, %s22
      %p283 = scmp.lt.s32.totalorder %s21, 3
      %s284 = scalar_select %p283, %s21, 3
      %p285 = scmp.lt.s32.totalorder %s282, 7
      %s286 = scalar_select %p285, %s282, 7
      %s287 = smul.addr %s284, 8
      %s288 = sadd.s32 %s286, %s287
      %s289 = smul.addr %s288, 8
      %s290 = scalar_lea.vmem %s0, %s289
      %s291 = smul.u32 8, %s22
      %p292 = scmp.lt.s32.totalorder %s21, 3
      %s293 = scalar_select %p292, %s21, 3
      %s294 = scalar_lea.vmem %s1, %s293
      %p295 = scmp.lt.s32.totalorder %s21, 3
      %s296 = scalar_select %p295, %s21, 3
      %p297 = scmp.lt.s32.totalorder %s22, 0
      %s298 = scalar_select %p297, %s22, 0
      %s299 = sadd.s32 %s298, %s296
      %s300 = scalar_lea.vmem %s2, %s299
      %p301 = scmp.lt.s32.totalorder %s21, 3
      %s302 = scalar_select %p301, %s21, 3
      %s303 = scalar_lea.vmem %s3, %s302
      %p304 = scmp.lt.s32.totalorder %s21, 3
      %s305 = scalar_select %p304, %s21, 3
      %s306 = scalar_lea.vmem %s4, %s305
      %p307 = scmp.lt.s32.totalorder %s21, 3
      %s308 = scalar_select %p307, %s21, 3
      %p309 = scmp.lt.s32.totalorder %s22, 0
      %s310 = scalar_select %p309, %s22, 0
      %s311 = sadd.s32 %s310, %s308
      %s312 = scalar_lea.vmem %s5, %s311
      %p313 = scmp.eq.s32.totalorder %s22, 0
      // Predicated region
      $region33: #{patch_loss.2} parent=31 // pred_check
        %p314 = pneg %p313
      $region34: #{patch_loss.2} parent=31 // pred_check_branch
        %316 = sbr.rel (%p314) target = $region36
      $region35: #{patch_loss.2} parent=31 // pred_region
        %317 = vst [vmem:[%s303] sm:$0x1] 0.0
        %318 = vst [vmem:[%s306] sm:$0x1] 0.0
      $region36: #{patch_loss.2} parent=31 // pred_fallthru
        _
      %v319 = vld [vmem:[%s290] sm:$0xff]
      %v320 = vld [vmem:[%s290 + $0x8] sm:$0xff]
      %v321 = vld [vmem:[%s290 + $0x10] sm:$0xff]
      %v322 = vld [vmem:[%s290 + $0x18] sm:$0xff]
      %v323 = vld [vmem:[%s290 + $0x20] sm:$0xff]
      %v324 = vld [vmem:[%s290 + $0x28] sm:$0xff]
      %v325 = vld [vmem:[%s290 + $0x30] sm:$0xff]
      %v326 = vld [vmem:[%s290 + $0x38] sm:$0xff]
      %v327 = vld [vmem:[%s294] sm:$0x1]
      %s328 = smul.u32 %s22, 64
      %v329 = vlaneseq
      %v330 = vand.u32 %v329, 127
      %v331 = vstv %s328
      %v332 = vadd.s32 %v331, %v330
      %vm333 = vcmp.lt.s32.totalorder %v332, 64
      %v335 = vlaneseq
      %v336 = vshrl.u32 %v335, 7
      %v337 = vsub.s32 0, %v336
      %v338 = vrot.slane %v327, %v337
      %v340 = vsub.f32 %v319, %v338
      %v341 = vsub.f32 %v320, %v338
      %v342 = vsub.f32 %v321, %v338
      %v343 = vsub.f32 %v322, %v338
      %v344 = vsub.f32 %v323, %v338
      %v345 = vsub.f32 %v324, %v338
      %v346 = vsub.f32 %v325, %v338
      %v347 = vsub.f32 %v326, %v338
      %v348 = vmul.f32 %v340, %v340
      %v349 = vmul.f32 %v341, %v341
      %v350 = vmul.f32 %v342, %v342
      %v351 = vmul.f32 %v343, %v343
      %v352 = vmul.f32 %v344, %v344
      %v353 = vmul.f32 %v345, %v345
      %v354 = vmul.f32 %v346, %v346
      %v355 = vmul.f32 %v347, %v347
      %vm356 = vcmask 261120
      %v357 = vsel %vm356, %v348, 0.0
      %358 = vadd.xlane.f32.xlu0 %v357
      %v359 = vpop.xlane.xlu0 %358
      %v360 = vsel %vm356, %v349, 0.0
      %361 = vadd.xlane.f32.xlu0 %v360
      %v362 = vpop.xlane.xlu0 %361
      %v363 = vsel %vm356, %v350, 0.0
      %364 = vadd.xlane.f32.xlu0 %v363
      %v365 = vpop.xlane.xlu0 %364
      %v366 = vsel %vm356, %v351, 0.0
      %367 = vadd.xlane.f32.xlu0 %v366
      %v368 = vpop.xlane.xlu0 %367
      %v369 = vsel %vm356, %v352, 0.0
      %370 = vadd.xlane.f32.xlu0 %v369
      %v371 = vpop.xlane.xlu0 %370
      %v372 = vsel %vm356, %v353, 0.0
      %373 = vadd.xlane.f32.xlu0 %v372
      %v374 = vpop.xlane.xlu0 %373
      %v375 = vsel %vm356, %v354, 0.0
      %376 = vadd.xlane.f32.xlu0 %v375
      %v377 = vpop.xlane.xlu0 %376
      %v378 = vsel %vm356, %v355, 0.0
      %379 = vadd.xlane.f32.xlu0 %v378
      %v380 = vpop.xlane.xlu0 %379
      %v389 = vlaneseq
      %v390 = vshrl.u32 %v389, 7
      %v391 = vsub.s32 %v330, %v390
      %v392 = vrot.slane %v359, %v391
      %v393 = vadd.s32 %v330, 4294967288
      %v394 = vlaneseq
      %v395 = vshrl.u32 %v394, 7
      %v396 = vsub.s32 %v393, %v395
      %v397 = vrot.slane %v362, %v396
      %vm398 = vcmask 130112
      %v399 = vsel %vm398, %v397, %v392
      %v400 = vadd.s32 %v330, 4294967280
      %v401 = vlaneseq
      %v402 = vshrl.u32 %v401, 7
      %v403 = vsub.s32 %v400, %v402
      %v404 = vrot.slane %v365, %v403
      %vm405 = vcmask 195712
      %v406 = vsel %vm405, %v404, %v399
      %v407 = vadd.s32 %v330, 4294967272
      %v408 = vlaneseq
      %v409 = vshrl.u32 %v408, 7
      %v410 = vsub.s32 %v407, %v409
      %v411 = vrot.slane %v368, %v410
      %vm412 = vcmask 261312
      %v413 = vsel %vm412, %v411, %v406
      %v414 = vadd.s32 %v330, 4294967264
      %v415 = vlaneseq
      %v416 = vshrl.u32 %v415, 7
      %v417 = vsub.s32 %v414, %v416
      %v418 = vrot.slane %v371, %v417
      %vm419 = vcmask 326912
      %v420 = vsel %vm419, %v418, %v413
      %v421 = vadd.s32 %v330, 4294967256
      %v422 = vlaneseq
      %v423 = vshrl.u32 %v422, 7
      %v424 = vsub.s32 %v421, %v423
      %v425 = vrot.slane %v374, %v424
      %vm426 = vcmask 392512
      %v427 = vsel %vm426, %v425, %v420
      %v428 = vadd.s32 %v330, 4294967248
      %v429 = vlaneseq
      %v430 = vshrl.u32 %v429, 7
      %v431 = vsub.s32 %v428, %v430
      %v432 = vrot.slane %v377, %v431
      %vm433 = vcmask 458112
      %v434 = vsel %vm433, %v432, %v427
      %v435 = vadd.s32 %v330, 4294967240
      %v436 = vlaneseq
      %v437 = vshrl.u32 %v436, 7
      %v438 = vsub.s32 %v435, %v437
      %v439 = vrot.slane %v380, %v438
      %vm440 = vcmask 523712
      %v441 = vsel %vm440, %v439, %v434
      %v443 = vsel %vm333, %v441, 0.0
      %v444 = vrsqrt.pop %v443
      %v445 = vmul.f32 %v443, %v444
      %vm446 = vcmp.eq.f32.partialorder %v443, inf
      %v447 = vsel %vm446, %v443, %v445
      %vm448 = vcmp.eq.f32.partialorder %v443, 0.0
      %v449 = vand.u32 %v443, 2147483648
      %v450 = vsel %vm448, %v449, %v447
      %v451 = vand.u32 2147483647, %v319
      %v452 = vand.u32 2147483647, %v320
      %v453 = vand.u32 2147483647, %v321
      %v454 = vand.u32 2147483647, %v322
      %v455 = vand.u32 2147483647, %v323
      %v456 = vand.u32 2147483647, %v324
      %v457 = vand.u32 2147483647, %v325
      %v458 = vand.u32 2147483647, %v326
      %v459 = vsel %vm356, %v451, 0.0
      %460 = vadd.xlane.f32.xlu0 %v459
      %v461 = vpop.xlane.xlu0 %460
      %v462 = vsel %vm356, %v452, 0.0
      %463 = vadd.xlane.f32.xlu0 %v462
      %v464 = vpop.xlane.xlu0 %463
      %v465 = vsel %vm356, %v453, 0.0
      %466 = vadd.xlane.f32.xlu0 %v465
      %v467 = vpop.xlane.xlu0 %466
      %v468 = vsel %vm356, %v454, 0.0
      %469 = vadd.xlane.f32.xlu0 %v468
      %v470 = vpop.xlane.xlu0 %469
      %v471 = vsel %vm356, %v455, 0.0
      %472 = vadd.xlane.f32.xlu0 %v471
      %v473 = vpop.xlane.xlu0 %472
      %v474 = vsel %vm356, %v456, 0.0
      %475 = vadd.xlane.f32.xlu0 %v474
      %v476 = vpop.xlane.xlu0 %475
      %v477 = vsel %vm356, %v457, 0.0
      %478 = vadd.xlane.f32.xlu0 %v477
      %v479 = vpop.xlane.xlu0 %478
      %v480 = vsel %vm356, %v458, 0.0
      %481 = vadd.xlane.f32.xlu0 %v480
      %v482 = vpop.xlane.xlu0 %481
      %v491 = vlaneseq
      %v492 = vshrl.u32 %v491, 7
      %v493 = vsub.s32 %v330, %v492
      %v494 = vrot.slane %v461, %v493
      %v495 = vlaneseq
      %v496 = vshrl.u32 %v495, 7
      %v497 = vsub.s32 %v393, %v496
      %v498 = vrot.slane %v464, %v497
      %v499 = vsel %vm398, %v498, %v494
      %v500 = vlaneseq
      %v501 = vshrl.u32 %v500, 7
      %v502 = vsub.s32 %v400, %v501
      %v503 = vrot.slane %v467, %v502
      %v504 = vsel %vm405, %v503, %v499
      %v505 = vlaneseq
      %v506 = vshrl.u32 %v505, 7
      %v507 = vsub.s32 %v407, %v506
      %v508 = vrot.slane %v470, %v507
      %v509 = vsel %vm412, %v508, %v504
      %v510 = vlaneseq
      %v511 = vshrl.u32 %v510, 7
      %v512 = vsub.s32 %v414, %v511
      %v513 = vrot.slane %v473, %v512
      %v514 = vsel %vm419, %v513, %v509
      %v515 = vlaneseq
      %v516 = vshrl.u32 %v515, 7
      %v517 = vsub.s32 %v421, %v516
      %v518 = vrot.slane %v476, %v517
      %v519 = vsel %vm426, %v518, %v514
      %v520 = vlaneseq
      %v521 = vshrl.u32 %v520, 7
      %v522 = vsub.s32 %v428, %v521
      %v523 = vrot.slane %v479, %v522
      %v524 = vsel %vm433, %v523, %v519
      %v525 = vlaneseq
      %v526 = vshrl.u32 %v525, 7
      %v527 = vsub.s32 %v435, %v526
      %v528 = vrot.slane %v482, %v527
      %v529 = vsel %vm440, %v528, %v524
      %v531 = vsel %vm333, %v529, 0.0
      %vm532 = vcmask 516096
      %533 = vst.msk [vmem:[%s312] sm:$0x1] %vm532, %v531
      %v534 = vld [vmem:[%s300] sm:$0x1]
      %v535 = vld [vmem:[%s303] sm:$0x1]
      %v536 = vmul.f32 %v534, %v450
      %v537 = vsel %vm532, %v536, 0.0
      %538 = vadd.xlane.f32.xlu0 %v537
      %v539 = vpop.xlane.xlu0 %538
      %v540 = vrot.slane %v539, 4
      %v541 = vadd.f32 %v539, %v540
      %v542 = vrot.slane %v541, 2
      %v543 = vadd.f32 %v541, %v542
      %v544 = vrot.slane %v543, 1
      %v545 = vadd.f32 %v543, %v544
      %s546 = vtos %v545
      %v547 = vstv %s546
      %v548 = vadd.f32 %v535, %v547
      %549 = vst [vmem:[%s303] sm:$0x1] %v548
      %v550 = vld [vmem:[%s306] sm:$0x1]
      %v551 = vsel %vm532, %v450, 0.0
      %552 = vadd.xlane.f32.xlu0 %v551
      %v553 = vpop.xlane.xlu0 %552
      %v554 = vrot.slane %v553, 4
      %v555 = vadd.f32 %v553, %v554
      %v556 = vrot.slane %v555, 2
      %v557 = vadd.f32 %v555, %v556
      %v558 = vrot.slane %v557, 1
      %v559 = vadd.f32 %v557, %v558
      %s560 = vtos %v559
      %v561 = vstv %s560
      %v562 = vadd.f32 %v550, %v561
      %563 = vst [vmem:[%s306] sm:$0x1] %v562
      %p564 = scmp.lt.s32.totalorder %s21, 3
      %s565 = scalar_select %p564, %s21, 3
      %s566 = scalar_lea.vmem %s3, %s565
      %p567 = scmp.lt.s32.totalorder %s21, 3
      %s568 = scalar_select %p567, %s21, 3
      %s569 = scalar_lea.vmem %s4, %s568
      %p570 = scmp.lt.s32.totalorder %s21, 3
      %s571 = scalar_select %p570, %s21, 3
      %p572 = scmp.lt.s32.totalorder %s22, 0
      %s573 = scalar_select %p572, %s22, 0
      %s574 = sadd.s32 %s573, %s571
      %s575 = scalar_lea.vmem %s5, %s574
      // Predicated region
      $region37: #{patch_loss.2} parent=31 // pred_check
        %p576 = pneg %p129
      $region38: #{patch_loss.2} parent=31 // pred_check_branch
        %578 = sbr.rel (%p576) target = $region40
      $region39: #{patch_loss.2} parent=31 // pred_region
        _
      $region40: #{patch_loss.2} parent=31 // pred_fallthru
        _
      // Predicated region
      $region41: #{patch_loss.2} parent=31 // pred_check
        %p579 = pneg %p155
      $region42: #{patch_loss.2} parent=31 // pred_check_branch
        %581 = sbr.rel (%p579) target = $region44
      $region43: #{patch_loss.2} parent=31 // pred_region
        _
      $region44: #{patch_loss.2} parent=31 // pred_fallthru
        _
      // Predicated region
      $region45: #{patch_loss.2} parent=31 // pred_check
        %p582 = pneg %p183
      $region46: #{patch_loss.2} parent=31 // pred_check_branch
        %584 = sbr.rel (%p582) target = $region48
      $region47: #{patch_loss.2} parent=31 // pred_region
        _
      $region48: #{patch_loss.2} parent=31 // pred_fallthru
        _
    $region32: #{patch_loss.2} parent=5 // pred_fallthru
      _
    %p585 = scmp.le.s32.totalorder 2, %s12
    // Predicated region
    $region49: #{patch_loss.2} parent=5 // pred_check
      %p586 = pneg %p585
    $region50: #{patch_loss.2} parent=5 // pred_check_branch
      %588 = sbr.rel (%p586) target = $region52
    $region51: #{patch_loss.2} parent=5 // pred_region
      %s589 = ssub.s32 %s12, 2
      // Predicated region
      $region53: #{patch_loss.2} parent=51 // pred_check
        %p590 = pneg %p135
      $region54: #{patch_loss.2} parent=51 // pred_check_branch
        %592 = sbr.rel (%p590) target = $region56
      $region55: #{patch_loss.2} parent=51 // pred_region
        %p593 = scmp.lt.s32.totalorder %s23, 3
        %s594 = scalar_select %p593, %s23, 3
        %s595 = scalar_lea.vmem %s3, %s594
      $region56: #{patch_loss.2} parent=51 // pred_fallthru
        _
      // Predicated region
      $region57: #{patch_loss.2} parent=51 // pred_check
        %p596 = pneg %p161
      $region58: #{patch_loss.2} parent=51 // pred_check_branch
        %598 = sbr.rel (%p596) target = $region60
      $region59: #{patch_loss.2} parent=51 // pred_region
        %p599 = scmp.lt.s32.totalorder %s23, 3
        %s600 = scalar_select %p599, %s23, 3
        %s601 = scalar_lea.vmem %s4, %s600
      $region60: #{patch_loss.2} parent=51 // pred_fallthru
        _
      // Predicated region
      $region61: #{patch_loss.2} parent=51 // pred_check
        %p602 = pneg %p189
      $region62: #{patch_loss.2} parent=51 // pred_check_branch
        %604 = sbr.rel (%p602) target = $region64
      $region63: #{patch_loss.2} parent=51 // pred_region
        %p605 = scmp.lt.s32.totalorder %s23, 3
        %s606 = scalar_select %p605, %s23, 3
        %p607 = scmp.lt.s32.totalorder %s24, 0
        %s608 = scalar_select %p607, %s24, 0
        %s609 = sadd.s32 %s608, %s606
        %s610 = scalar_lea.vmem %s5, %s609
      $region64: #{patch_loss.2} parent=51 // pred_fallthru
        _
    $region52: #{patch_loss.2} parent=5 // pred_fallthru
      _
  $region6: #{patch_loss.2} parent=0 // loop_footer
    %s16 = sadd.s32 1, %s12
  $region7: #{patch_loss.2} parent=0 // loop_footer_branch
    %11 = sbr.rel target = $region3
  $region8: #{patch_loss.2} parent=0 // loop_exit
    _

</llo_original>
